<compile_context>
chip_gen: v7x
topology: tpu7x:2x2x1
jax: 0.10.0
libtpu: 0.0.40
codegen_flags: <defaults>
</compile_context>

<pallas_src>
import functools

import jax
import jax.numpy as jnp
from jax.experimental import pallas as pl
from jax.experimental.pallas import tpu as pltpu

_NEG_LARGE = -1e30  # masks padded logit columns before log_softmax (f32 path only)


def _round_up(n, m):
    return (n + m - 1) // m * m


def _lane_pad(d):
    # 256-wide tiles fill the v6e/v7x MXU column dimension; 128 for narrow layers.
    return _round_up(d, 256) if d >= 256 else _round_up(d, 128)


# ---------------------------------------------------------------------------
# Fused Pallas kernel: all layers + log_softmax for one batch tile
# ---------------------------------------------------------------------------
def _mlp_fused_kernel(*refs, n_layers, num_classes):
    """refs = (x_ref, w0_ref, b0_ref, ..., w{n-1}_ref, b{n-1}_ref, o_ref).

    x_ref:  (TM, Din_pad)       bf16
    wi_ref: (Di_pad, Di+1_pad)  bf16  (zero-padded)
    bi_ref: (1, Di+1_pad)       f32   (zero-padded)
    o_ref:  (TM, Dcls_pad)      f32
    """
    x_ref = refs[0]
    o_ref = refs[1 + 2 * n_layers]

    h = x_ref[...]  # bf16 activation, stays on-chip (vregs/VMEM) across layers
    for i in range(n_layers):
        w = refs[1 + 2 * i][...]
        b = refs[2 + 2 * i][...]  # (1, Dout_pad), broadcasts over batch rows
        y = jnp.dot(h, w, preferred_element_type=jnp.float32) + b
        if i != n_layers - 1:
            h = jnp.maximum(y, 0.0).astype(jnp.bfloat16)
        else:
            # Mask padded logit columns so they do not perturb log_softmax.
            col = jax.lax.broadcasted_iota(jnp.int32, y.shape, 1)
            y = jnp.where(col < num_classes, y, _NEG_LARGE)
            m = jnp.max(y, axis=-1, keepdims=True)
            shifted = y - m
            lse = jnp.log(jnp.sum(jnp.exp(shifted), axis=-1, keepdims=True))
            o_ref[...] = (shifted - lse).astype(o_ref.dtype)


# ---------------------------------------------------------------------------
# Parameter init (deterministic, mimics PyTorch nn.Linear default init)
# ---------------------------------------------------------------------------
def init_mlp_params(key, input_size, num_classes, hidden_layers_sizes):
    layer_sizes = [input_size] + list(hidden_layers_sizes) + [num_classes]
    params = []
    for i in range(len(layer_sizes) - 1):
        fan_in, fan_out = layer_sizes[i], layer_sizes[i + 1]
        key, kw, kb = jax.random.split(key, 3)
        bound = 1.0 / jnp.sqrt(fan_in)
        # stored as (Din, Dout) so the kernel does x @ w directly
        w = jax.random.uniform(kw, (fan_in, fan_out), jnp.float32, -bound, bound)
        b = jax.random.uniform(kb, (fan_out,), jnp.float32, -bound, bound)
        params.append((w, b))
    return params


# ---------------------------------------------------------------------------
# One-time parameter preparation: pad to lane-dense shapes + cast to bf16.
# Done ONCE (not per forward call) so repeated inference pays no padding traffic.
# ---------------------------------------------------------------------------
def prepare_mlp_params(params, input_size):
    dims = [input_size] + [w.shape[1] for w, _ in params]
    dims_pad = tuple(_lane_pad(d) for d in dims)
    flat = []
    for li, (w, b) in enumerate(params):
        din_p, dout_p = dims_pad[li], dims_pad[li + 1]
        w_p = jnp.zeros((din_p, dout_p), jnp.bfloat16)
        w_p = w_p.at[: w.shape[0], : w.shape[1]].set(w.astype(jnp.bfloat16))
        b_p = jnp.zeros((1, dout_p), jnp.float32)
        b_p = b_p.at[0, : b.shape[0]].set(b)
        flat += [w_p, b_p]
    flat = tuple(jax.block_until_ready(a) for a in flat)
    return {
        "flat": flat,
        "dims_pad": dims_pad,
        "input_size": input_size,
        "num_classes": params[-1][1].shape[0],
        "n_layers": len(params),
    }


# ---------------------------------------------------------------------------
# Forward pass (matches MLP.forward)
# ---------------------------------------------------------------------------
def mlp_forward(x, prepared):
    flat_params = prepared["flat"]
    dims_pad = prepared["dims_pad"]
    num_classes = prepared["num_classes"]
    n_layers = prepared["n_layers"]

    # x.view(x.size(0), -1)
    B = x.shape[0]
    h = x.reshape(B, -1)
    Din = h.shape[1]
    Din_pad, out_pad = dims_pad[0], dims_pad[-1]

    # --- batch tile selection (multiple of 16 for packed bf16 (16,128) tiles) ---
    TM = min(512, _round_up(B, 16))

    # Explicit VMEM budget: weights are single-buffered (Buffered(1)), x/out
    # tiles are double-buffered by the pipeline.  Stay well under v5e's scoped
    # default is exceeded safely via vmem_limit_bytes, and under v7x's 64 MiB.
    weight_bytes = sum(a.size * a.dtype.itemsize for a in flat_params)

    def _tile_bytes(tm):
        return 2 * tm * Din_pad * 2 + 2 * tm * out_pad * 4

    tile_budget = (40 << 20) - weight_bytes
    while TM > 16 and _tile_bytes(TM) > tile_budget:
        TM //= 2
    TM = max(16, _round_up(TM, 16))
    # TODO(synk): if the resident weight set itself outgrows ~32 MiB, tile the
    # widest layer's K/N with a reduction grid axis instead of keeping it resident.

    # Give v7x's second TensorCore work when the batch is large enough to care
    # (with tiny B the kernel is latency-bound and one grid step is optimal).
    if B >= 32 and _round_up(B, TM) // TM < 2:
        TM = max(16, _round_up(pl.cdiv(B, 2), 16))

    B_pad = _round_up(B, TM)
    vmem_limit = int(min(64 << 20, max(weight_bytes + _tile_bytes(TM), 4 << 20) * 2))

    # --- input prep: cast to bf16, pad only if actually needed ---------------
    x_b = h.astype(jnp.bfloat16)
    pad_rows, pad_cols = B_pad - B, Din_pad - Din
    if pad_rows or pad_cols:
        x_b = jnp.pad(x_b, ((0, pad_rows), (0, pad_cols)))

    kernel = functools.partial(
        _mlp_fused_kernel, n_layers=n_layers, num_classes=num_classes
    )

    def _make_specs(single_buffer_weights):
        specs = [pl.BlockSpec((TM, Din_pad), lambda i: (i, 0))]
        kw = {"pipeline_mode": pl.Buffered(1)} if single_buffer_weights else {}
        for li in range(n_layers):
            din_p, dout_p = dims_pad[li], dims_pad[li + 1]
            # constant index_map -> weights/biases stay VMEM-resident across grid
            specs.append(pl.BlockSpec((din_p, dout_p), lambda i: (0, 0), **kw))
            specs.append(pl.BlockSpec((1, dout_p), lambda i: (0, 0), **kw))
        return specs

    def _call(specs):
        return pl.pallas_call(
            kernel,
            grid=(B_pad // TM,),
            out_shape=jax.ShapeDtypeStruct((B_pad, out_pad), jnp.float32),
            in_specs=specs,
            out_specs=pl.BlockSpec((TM, out_pad), lambda i: (i, 0)),
            compiler_params=pltpu.CompilerParams(
                dimension_semantics=("parallel",),
                vmem_limit_bytes=vmem_limit,
            ),
        )(x_b, *flat_params)

    try:
        out_p = _call(_make_specs(True))
    except Exception:
        # Fallback for jax versions without BlockSpec(pipeline_mode=...).
        out_p = _call(_make_specs(False))

    # Strip batch/lane padding.
    return out_p[:B, :num_classes]


# ---------------------------------------------------------------------------
# Reference (pure JAX, same bf16-input / f32-accumulate matmul recipe)
# ---------------------------------------------------------------------------
def mlp_forward_ref(x, params):
    B = x.shape[0]
    h = x.reshape(B, -1).astype(jnp.bfloat16)
    n_layers = len(params)
    for i, (w, b) in enumerate(params):
        y = jnp.dot(h, w.astype(jnp.bfloat16), preferred_element_type=jnp.float32) + b
        if i != n_layers - 1:
            h = jnp.maximum(y, 0.0).astype(jnp.bfloat16)
        else:
            h = y
    return jax.nn.log_softmax(h, axis=1)


if __name__ == "__main__":
    key = jax.random.PRNGKey(0)
    kx, kp = jax.random.split(key)

    # small shapes consistent with the module: x is (B, C, H, W), flattened
    B, C, H, W = 2, 4, 16, 16
    input_size = C * H * W          # 1024
    hidden_layers_sizes = [32, 32]
    num_classes = 10

    x = jax.random.normal(kx, (B, C, H, W), jnp.float32)
    params = init_mlp_params(kp, input_size, num_classes, hidden_layers_sizes)
    prepared = prepare_mlp_params(params, input_size)   # pad/cast ONCE

    out = mlp_forward(x, prepared)
    out = jax.block_until_ready(out)

    ref = mlp_forward_ref(x, params)
    assert out.shape == (B, num_classes)
    assert jnp.allclose(out, ref, atol=2e-3, rtol=2e-3), "mismatch vs reference"
    # log_softmax rows must sum (in prob space) to 1
    assert jnp.allclose(jnp.exp(out).sum(axis=1), 1.0, atol=1e-3)

    print("KERNEL_OK")
</pallas_src>

<mosaic_0001>
module attributes {stable_mosaic.version = 11 : i64} {
  func.func @_mlp_fused_kernel(%arg0: i32, %arg1: memref<16x1024xbf16, #tpu.memory_space<vmem>>, %arg2: memref<1024x128xbf16, #tpu.memory_space<vmem>>, %arg3: memref<1x128xf32, #tpu.memory_space<vmem>>, %arg4: memref<128x128xbf16, #tpu.memory_space<vmem>>, %arg5: memref<1x128xf32, #tpu.memory_space<vmem>>, %arg6: memref<128x128xbf16, #tpu.memory_space<vmem>>, %arg7: memref<1x128xf32, #tpu.memory_space<vmem>>, %arg8: memref<16x128xf32, #tpu.memory_space<vmem>>) attributes {dimension_semantics = [#tpu.dimension_semantics<parallel>], iteration_bounds = array<i64: 1>, scalar_prefetch = 0 : i64, scratch_operands = 0 : i64, tpu.core_type = #tpu.core_type<tc>, window_params = [{transform_indices = @transform_0, window_bounds = array<i64: 16, 1024>}, {pipeline_mode = #tpu.pipeline_mode<synchronous>, transform_indices = @transform_1, window_bounds = array<i64: 1024, 128>}, {pipeline_mode = #tpu.pipeline_mode<synchronous>, transform_indices = @transform_2, window_bounds = array<i64: 1, 128>}, {pipeline_mode = #tpu.pipeline_mode<synchronous>, transform_indices = @transform_3, window_bounds = array<i64: 128, 128>}, {pipeline_mode = #tpu.pipeline_mode<synchronous>, transform_indices = @transform_4, window_bounds = array<i64: 1, 128>}, {pipeline_mode = #tpu.pipeline_mode<synchronous>, transform_indices = @transform_5, window_bounds = array<i64: 128, 128>}, {pipeline_mode = #tpu.pipeline_mode<synchronous>, transform_indices = @transform_6, window_bounds = array<i64: 1, 128>}, {transform_indices = @transform_7, window_bounds = array<i64: 16, 128>}]} {
    %c0 = arith.constant 0 : index
    %c0_0 = arith.constant 0 : index
    %0 = vector.load %arg1[%c0, %c0_0] : memref<16x1024xbf16, #tpu.memory_space<vmem>>, vector<16x1024xbf16>
    %c0_1 = arith.constant 0 : index
    %c0_2 = arith.constant 0 : index
    %1 = vector.load %arg2[%c0_1, %c0_2] : memref<1024x128xbf16, #tpu.memory_space<vmem>>, vector<1024x128xbf16>
    %c0_3 = arith.constant 0 : index
    %c0_4 = arith.constant 0 : index
    %2 = vector.load %arg3[%c0_3, %c0_4] : memref<1x128xf32, #tpu.memory_space<vmem>>, vector<1x128xf32>
    %cst = arith.constant dense<0.000000e+00> : vector<16x128xf32>
    %3 = tpu.matmul %0, %1, %cst {dimension_numbers = #tpu.dot_dimension_numbers<[1], [0], [0], [1], [0, 0, 1, 1], [], []>} : vector<16x1024xbf16>, vector<1024x128xbf16>, vector<16x128xf32> -> vector<16x128xf32>
    %4 = vector.broadcast %2 : vector<1x128xf32> to vector<16x128xf32>
    %5 = arith.addf %3, %4 : vector<16x128xf32>
    %cst_5 = arith.constant 0.000000e+00 : f32
    %6 = vector.broadcast %cst_5 : f32 to vector<16x128xf32>
    %7 = arith.maximumf %5, %6 : vector<16x128xf32>
    %8 = arith.truncf %7 : vector<16x128xf32> to vector<16x128xbf16>
    %c0_6 = arith.constant 0 : index
    %c0_7 = arith.constant 0 : index
    %9 = vector.load %arg4[%c0_6, %c0_7] : memref<128x128xbf16, #tpu.memory_space<vmem>>, vector<128x128xbf16>
    %c0_8 = arith.constant 0 : index
    %c0_9 = arith.constant 0 : index
    %10 = vector.load %arg5[%c0_8, %c0_9] : memref<1x128xf32, #tpu.memory_space<vmem>>, vector<1x128xf32>
    %cst_10 = arith.constant dense<0.000000e+00> : vector<16x128xf32>
    %11 = tpu.matmul %8, %9, %cst_10 {dimension_numbers = #tpu.dot_dimension_numbers<[1], [0], [0], [1], [0, 0, 1, 1], [], []>} : vector<16x128xbf16>, vector<128x128xbf16>, vector<16x128xf32> -> vector<16x128xf32>
    %12 = vector.broadcast %10 : vector<1x128xf32> to vector<16x128xf32>
    %13 = arith.addf %11, %12 : vector<16x128xf32>
    %cst_11 = arith.constant 0.000000e+00 : f32
    %14 = vector.broadcast %cst_11 : f32 to vector<16x128xf32>
    %15 = arith.maximumf %13, %14 : vector<16x128xf32>
    %16 = arith.truncf %15 : vector<16x128xf32> to vector<16x128xbf16>
    %c0_12 = arith.constant 0 : index
    %c0_13 = arith.constant 0 : index
    %17 = vector.load %arg6[%c0_12, %c0_13] : memref<128x128xbf16, #tpu.memory_space<vmem>>, vector<128x128xbf16>
    %c0_14 = arith.constant 0 : index
    %c0_15 = arith.constant 0 : index
    %18 = vector.load %arg7[%c0_14, %c0_15] : memref<1x128xf32, #tpu.memory_space<vmem>>, vector<1x128xf32>
    %cst_16 = arith.constant dense<0.000000e+00> : vector<16x128xf32>
    %19 = tpu.matmul %16, %17, %cst_16 {dimension_numbers = #tpu.dot_dimension_numbers<[1], [0], [0], [1], [0, 0, 1, 1], [], []>} : vector<16x128xbf16>, vector<128x128xbf16>, vector<16x128xf32> -> vector<16x128xf32>
    %20 = vector.broadcast %18 : vector<1x128xf32> to vector<16x128xf32>
    %21 = arith.addf %19, %20 : vector<16x128xf32>
    %22 = tpu.iota {dimensions = array<i32: 1>} : vector<16x128xi32>
    %c10_i32 = arith.constant 10 : i32
    %23 = vector.broadcast %c10_i32 : i32 to vector<16x128xi32>
    %24 = arith.cmpi slt, %22, %23 : vector<16x128xi32>
    %cst_17 = arith.constant -1.000000e+30 : f32
    %25 = vector.broadcast %cst_17 : f32 to vector<16x128xf32>
    %26 = arith.select %24, %21, %25 : vector<16x128xi1>, vector<16x128xf32>
    %cst_18 = arith.constant dense<0xFF800000> : vector<16xf32>
    %27 = vector.multi_reduction <maximumf>, %26, %cst_18 [1] : vector<16x128xf32> to vector<16xf32>
    %28 = vector.shape_cast %27 : vector<16xf32> to vector<16x1xf32>
    %29 = vector.broadcast %28 : vector<16x1xf32> to vector<16x128xf32>
    %30 = arith.subf %26, %29 : vector<16x128xf32>
    %31 = math.exp %30 : vector<16x128xf32>
    %cst_19 = arith.constant dense<0.000000e+00> : vector<16xf32>
    %32 = vector.multi_reduction <add>, %31, %cst_19 [1] : vector<16x128xf32> to vector<16xf32>
    %33 = vector.shape_cast %32 : vector<16xf32> to vector<16x1xf32>
    %34 = math.log %33 : vector<16x1xf32>
    %35 = vector.broadcast %34 : vector<16x1xf32> to vector<16x128xf32>
    %36 = arith.subf %30, %35 : vector<16x128xf32>
    %c0_20 = arith.constant 0 : index
    %c0_21 = arith.constant 0 : index
    %37 = vector.load %arg8[%c0_20, %c0_21] : memref<16x128xf32, #tpu.memory_space<vmem>>, vector<16x128xf32>
    tpu.vector_store %arg8[%c0_20, %c0_21], %36 {strides = array<i32>} : memref<16x128xf32, #tpu.memory_space<vmem>>, vector<16x128xf32>,
    return
  }
  func.func @transform_0(%arg0: i32) -> (i32, i32) {
    %c0_i32 = arith.constant 0 : i32
    %c0_i32_0 = arith.constant 0 : i32
    return %arg0, %c0_i32 : i32, i32
  }
  func.func @transform_1(%arg0: i32) -> (i32, i32) {
    %c0_i32 = arith.constant 0 : i32
    %c0_i32_0 = arith.constant 0 : i32
    %c0_i32_1 = arith.constant 0 : i32
    return %c0_i32, %c0_i32_0 : i32, i32
  }
  func.func @transform_2(%arg0: i32) -> (i32, i32) {
    %c0_i32 = arith.constant 0 : i32
    %c0_i32_0 = arith.constant 0 : i32
    %c0_i32_1 = arith.constant 0 : i32
    return %c0_i32, %c0_i32_0 : i32, i32
  }
  func.func @transform_3(%arg0: i32) -> (i32, i32) {
    %c0_i32 = arith.constant 0 : i32
    %c0_i32_0 = arith.constant 0 : i32
    %c0_i32_1 = arith.constant 0 : i32
    return %c0_i32, %c0_i32_0 : i32, i32
  }
  func.func @transform_4(%arg0: i32) -> (i32, i32) {
    %c0_i32 = arith.constant 0 : i32
    %c0_i32_0 = arith.constant 0 : i32
    %c0_i32_1 = arith.constant 0 : i32
    return %c0_i32, %c0_i32_0 : i32, i32
  }
  func.func @transform_5(%arg0: i32) -> (i32, i32) {
    %c0_i32 = arith.constant 0 : i32
    %c0_i32_0 = arith.constant 0 : i32
    %c0_i32_1 = arith.constant 0 : i32
    return %c0_i32, %c0_i32_0 : i32, i32
  }
  func.func @transform_6(%arg0: i32) -> (i32, i32) {
    %c0_i32 = arith.constant 0 : i32
    %c0_i32_0 = arith.constant 0 : i32
    %c0_i32_1 = arith.constant 0 : i32
    return %c0_i32, %c0_i32_0 : i32, i32
  }
  func.func @transform_7(%arg0: i32) -> (i32, i32) {
    %c0_i32 = arith.constant 0 : i32
    %c0_i32_0 = arith.constant 0 : i32
    return %arg0, %c0_i32 : i32, i32
  }
}

module attributes {stable_mosaic.version = 11 : i64} {
  func.func @_mlp_fused_kernel(%arg0: i32, %arg1: memref<16x1024xbf16, #tpu.memory_space<vmem>>, %arg2: memref<1024x128xbf16, #tpu.memory_space<vmem>>, %arg3: memref<1x128xf32, #tpu.memory_space<vmem>>, %arg4: memref<128x128xbf16, #tpu.memory_space<vmem>>, %arg5: memref<1x128xf32, #tpu.memory_space<vmem>>, %arg6: memref<128x128xbf16, #tpu.memory_space<vmem>>, %arg7: memref<1x128xf32, #tpu.memory_space<vmem>>, %arg8: memref<16x128xf32, #tpu.memory_space<vmem>>) attributes {dimension_semantics = [#tpu.dimension_semantics<parallel>], iteration_bounds = array<i64: 1>, scalar_prefetch = 0 : i64, scratch_operands = 0 : i64, tpu.core_type = #tpu.core_type<tc>, window_params = [{transform_indices = @transform_0, window_bounds = array<i64: 16, 1024>}, {pipeline_mode = #tpu.pipeline_mode<synchronous>, transform_indices = @transform_1, window_bounds = array<i64: 1024, 128>}, {pipeline_mode = #tpu.pipeline_mode<synchronous>, transform_indices = @transform_2, window_bounds = array<i64: 1, 128>}, {pipeline_mode = #tpu.pipeline_mode<synchronous>, transform_indices = @transform_3, window_bounds = array<i64: 128, 128>}, {pipeline_mode = #tpu.pipeline_mode<synchronous>, transform_indices = @transform_4, window_bounds = array<i64: 1, 128>}, {pipeline_mode = #tpu.pipeline_mode<synchronous>, transform_indices = @transform_5, window_bounds = array<i64: 128, 128>}, {pipeline_mode = #tpu.pipeline_mode<synchronous>, transform_indices = @transform_6, window_bounds = array<i64: 1, 128>}, {transform_indices = @transform_7, window_bounds = array<i64: 16, 128>}]} {
    %c0 = arith.constant 0 : index
    %c0_0 = arith.constant 0 : index
    %0 = vector.load %arg1[%c0, %c0_0] : memref<16x1024xbf16, #tpu.memory_space<vmem>>, vector<16x1024xbf16>
    %c0_1 = arith.constant 0 : index
    %c0_2 = arith.constant 0 : index
    %1 = vector.load %arg2[%c0_1, %c0_2] : memref<1024x128xbf16, #tpu.memory_space<vmem>>, vector<1024x128xbf16>
    %c0_3 = arith.constant 0 : index
    %c0_4 = arith.constant 0 : index
    %2 = vector.load %arg3[%c0_3, %c0_4] : memref<1x128xf32, #tpu.memory_space<vmem>>, vector<1x128xf32>
    %cst = arith.constant dense<0.000000e+00> : vector<16x128xf32>
    %3 = tpu.matmul %0, %1, %cst {dimension_numbers = #tpu.dot_dimension_numbers<[1], [0], [0], [1], [0, 0, 1, 1], [], []>} : vector<16x1024xbf16>, vector<1024x128xbf16>, vector<16x128xf32> -> vector<16x128xf32>
    %4 = vector.broadcast %2 : vector<1x128xf32> to vector<16x128xf32>
    %5 = arith.addf %3, %4 : vector<16x128xf32>
    %cst_5 = arith.constant 0.000000e+00 : f32
    %6 = vector.broadcast %cst_5 : f32 to vector<16x128xf32>
    %7 = arith.maximumf %5, %6 : vector<16x128xf32>
    %8 = arith.truncf %7 : vector<16x128xf32> to vector<16x128xbf16>
    %c0_6 = arith.constant 0 : index
    %c0_7 = arith.constant 0 : index
    %9 = vector.load %arg4[%c0_6, %c0_7] : memref<128x128xbf16, #tpu.memory_space<vmem>>, vector<128x128xbf16>
    %c0_8 = arith.constant 0 : index
    %c0_9 = arith.constant 0 : index
    %10 = vector.load %arg5[%c0_8, %c0_9] : memref<1x128xf32, #tpu.memory_space<vmem>>, vector<1x128xf32>
    %cst_10 = arith.constant dense<0.000000e+00> : vector<16x128xf32>
    %11 = tpu.matmul %8, %9, %cst_10 {dimension_numbers = #tpu.dot_dimension_numbers<[1], [0], [0], [1], [0, 0, 1, 1], [], []>} : vector<16x128xbf16>, vector<128x128xbf16>, vector<16x128xf32> -> vector<16x128xf32>
    %12 = vector.broadcast %10 : vector<1x128xf32> to vector<16x128xf32>
    %13 = arith.addf %11, %12 : vector<16x128xf32>
    %cst_11 = arith.constant 0.000000e+00 : f32
    %14 = vector.broadcast %cst_11 : f32 to vector<16x128xf32>
    %15 = arith.maximumf %13, %14 : vector<16x128xf32>
    %16 = arith.truncf %15 : vector<16x128xf32> to vector<16x128xbf16>
    %c0_12 = arith.constant 0 : index
    %c0_13 = arith.constant 0 : index
    %17 = vector.load %arg6[%c0_12, %c0_13] : memref<128x128xbf16, #tpu.memory_space<vmem>>, vector<128x128xbf16>
    %c0_14 = arith.constant 0 : index
    %c0_15 = arith.constant 0 : index
    %18 = vector.load %arg7[%c0_14, %c0_15] : memref<1x128xf32, #tpu.memory_space<vmem>>, vector<1x128xf32>
    %cst_16 = arith.constant dense<0.000000e+00> : vector<16x128xf32>
    %19 = tpu.matmul %16, %17, %cst_16 {dimension_numbers = #tpu.dot_dimension_numbers<[1], [0], [0], [1], [0, 0, 1, 1], [], []>} : vector<16x128xbf16>, vector<128x128xbf16>, vector<16x128xf32> -> vector<16x128xf32>
    %20 = vector.broadcast %18 : vector<1x128xf32> to vector<16x128xf32>
    %21 = arith.addf %19, %20 : vector<16x128xf32>
    %22 = tpu.iota {dimensions = array<i32: 1>} : vector<16x128xi32>
    %c10_i32 = arith.constant 10 : i32
    %23 = vector.broadcast %c10_i32 : i32 to vector<16x128xi32>
    %24 = arith.cmpi slt, %22, %23 : vector<16x128xi32>
    %cst_17 = arith.constant -1.000000e+30 : f32
    %25 = vector.broadcast %cst_17 : f32 to vector<16x128xf32>
    %26 = arith.select %24, %21, %25 : vector<16x128xi1>, vector<16x128xf32>
    %cst_18 = arith.constant dense<0xFF800000> : vector<16xf32>
    %27 = vector.multi_reduction <maximumf>, %26, %cst_18 [1] : vector<16x128xf32> to vector<16xf32>
    %28 = vector.shape_cast %27 : vector<16xf32> to vector<16x1xf32>
    %29 = vector.broadcast %28 : vector<16x1xf32> to vector<16x128xf32>
    %30 = arith.subf %26, %29 : vector<16x128xf32>
    %31 = math.exp %30 : vector<16x128xf32>
    %cst_19 = arith.constant dense<0.000000e+00> : vector<16xf32>
    %32 = vector.multi_reduction <add>, %31, %cst_19 [1] : vector<16x128xf32> to vector<16xf32>
    %33 = vector.shape_cast %32 : vector<16xf32> to vector<16x1xf32>
    %34 = math.log %33 : vector<16x1xf32>
    %35 = vector.broadcast %34 : vector<16x1xf32> to vector<16x128xf32>
    %36 = arith.subf %30, %35 : vector<16x128xf32>
    %c0_20 = arith.constant 0 : index
    %c0_21 = arith.constant 0 : index
    %37 = vector.load %arg8[%c0_20, %c0_21] : memref<16x128xf32, #tpu.memory_space<vmem>>, vector<16x128xf32>
    tpu.vector_store %arg8[%c0_20, %c0_21], %36 {strides = array<i32>} : memref<16x128xf32, #tpu.memory_space<vmem>>, vector<16x128xf32>,
    return
  }
  func.func @transform_0(%arg0: i32) -> (i32, i32) {
    %c0_i32 = arith.constant 0 : i32
    %c0_i32_0 = arith.constant 0 : i32
    return %arg0, %c0_i32 : i32, i32
  }
  func.func @transform_1(%arg0: i32) -> (i32, i32) {
    %c0_i32 = arith.constant 0 : i32
    %c0_i32_0 = arith.constant 0 : i32
    %c0_i32_1 = arith.constant 0 : i32
    return %c0_i32, %c0_i32_0 : i32, i32
  }
  func.func @transform_2(%arg0: i32) -> (i32, i32) {
    %c0_i32 = arith.constant 0 : i32
    %c0_i32_0 = arith.constant 0 : i32
    %c0_i32_1 = arith.constant 0 : i32
    return %c0_i32, %c0_i32_0 : i32, i32
  }
  func.func @transform_3(%arg0: i32) -> (i32, i32) {
    %c0_i32 = arith.constant 0 : i32
    %c0_i32_0 = arith.constant 0 : i32
    %c0_i32_1 = arith.constant 0 : i32
    return %c0_i32, %c0_i32_0 : i32, i32
  }
  func.func @transform_4(%arg0: i32) -> (i32, i32) {
    %c0_i32 = arith.constant 0 : i32
    %c0_i32_0 = arith.constant 0 : i32
    %c0_i32_1 = arith.constant 0 : i32
    return %c0_i32, %c0_i32_0 : i32, i32
  }
  func.func @transform_5(%arg0: i32) -> (i32, i32) {
    %c0_i32 = arith.constant 0 : i32
    %c0_i32_0 = arith.constant 0 : i32
    %c0_i32_1 = arith.constant 0 : i32
    return %c0_i32, %c0_i32_0 : i32, i32
  }
  func.func @transform_6(%arg0: i32) -> (i32, i32) {
    %c0_i32 = arith.constant 0 : i32
    %c0_i32_0 = arith.constant 0 : i32
    %c0_i32_1 = arith.constant 0 : i32
    return %c0_i32, %c0_i32_0 : i32, i32
  }
  func.func @transform_7(%arg0: i32) -> (i32, i32) {
    %c0_i32 = arith.constant 0 : i32
    %c0_i32_0 = arith.constant 0 : i32
    return %arg0, %c0_i32 : i32, i32
  }
}

</mosaic_0001>

<llo_original>
// kernel: tpu_custom_call.1
$region0: #{tpu_custom_call.1}
  #allocation0 [shape = 'u32[]', space=smem, size = 0x4, offset = 0x4, fixed_abs, tag = 'smem constant byte address 0x4 - core index']
  #allocation1 [shape = 'u32[144,128]{1,0:T(1,128)}', space=vmem, size = 0x12000, scoped, tag = 'internal scratch']
  %s0 = inlined_call_operand.hbm [shape: bf16[16,1024], index: 0, kind: input, shape index: {}]
  %s1 = inlined_call_operand.hbm [shape: bf16[1024,128], index: 1, kind: input, shape index: {}]
  %s2 = inlined_call_operand.vmem [shape: f32[1,128], index: 2, kind: input, shape index: {}]
  %s3 = inlined_call_operand.hbm [shape: bf16[128,128], index: 3, kind: input, shape index: {}]
  %s4 = inlined_call_operand.vmem [shape: f32[1,128], index: 4, kind: input, shape index: {}]
  %s5 = inlined_call_operand.hbm [shape: bf16[128,128], index: 5, kind: input, shape index: {}]
  %s6 = inlined_call_operand.vmem [shape: f32[1,128], index: 6, kind: input, shape index: {}]
  %s7 = inlined_call_operand.hbm [shape: f32[16,128], index: 7, kind: output, shape index: {}]
  %s8 = sld [smem:[#allocation0]]
  $region54: #{tpu_custom_call.1} parent=0
    _
  %s10 = ssub.s32 1, %s8
  %s11 = scalar_select 0, %s10, %s8
  $region1: #{tpu_custom_call.1} parent=0
    #allocation2 [shape = 'u8[32768]{0}', space=vmem, size = 0x8000, scoped, tag = 'input window, operand 0, single buffered']
    #allocation3 [shape = 's32[1]{0}', space=sflag, size = 0x4, scoped, tag = 'scoped memory for tpu_custom_call.1']
    #allocation4 [shape = 's32[1]{0}', space=sflag, size = 0x4, scoped, tag = 'scoped memory for tpu_custom_call.1']
    #allocation5 [shape = 'u8[262144]{0}', space=vmem, size = 0x40000, scoped, tag = 'input window, operand 1, single buffered']
    #allocation6 [shape = 's32[1]{0}', space=sflag, size = 0x4, scoped, tag = 'scoped memory for tpu_custom_call.1']
    #allocation7 [shape = 'u8[32768]{0}', space=vmem, size = 0x8000, scoped, tag = 'input window, operand 3, single buffered']
    #allocation8 [shape = 'u8[32768]{0}', space=vmem, size = 0x8000, scoped, tag = 'input window, operand 5, single buffered']
    #allocation9 [shape = 's32[1]{0}', space=sflag, size = 0x4, scoped, tag = 'scoped memory for tpu_custom_call.1']
    #allocation10 [shape = 'u8[8192]{0}', space=vmem, size = 0x2000, scoped, tag = 'output window, operand 0, single buffered']
    %12 = vsyncpa [#allocation3], 0
    %13 = vsyncpa [#allocation6], 0
    %14 = vsyncpa [#allocation9], 0
    %15 = vsyncpa [#allocation4], 0
    // Predicated region
    $region2: #{tpu_custom_call.1} parent=1 // pred_check
      _
    $region3: #{tpu_custom_call.1} parent=1 // pred_check_branch
      %17 = sbr.rel (0) target = $region5
    $region4: #{tpu_custom_call.1} parent=1 // pred_region
      %s19 = ssub.s32 1024, 1024
      %20 = vsyncadd [#allocation3], %s19
      %s21 = sshll.u32 [#allocation2], 4
      %s22 = int_to_ptr.vmem [resolvable:$true] %s21
      %27 = dma.hbm_to_vmem [thread:$0]  %s0, 1024, %s22, [#allocation3], 512, 512, 32
    $region5: #{tpu_custom_call.1} parent=1 // pred_fallthru
      _
    // Predicated region
    $region6: #{tpu_custom_call.1} parent=1 // pred_check
      _
    $region7: #{tpu_custom_call.1} parent=1 // pred_check_branch
      %29 = sbr.rel (0) target = $region9
    $region8: #{tpu_custom_call.1} parent=1 // pred_region
      %s31 = ssub.s32 8192, 8192
      %32 = vsyncadd [#allocation6], %s31
      %s33 = sshll.u32 [#allocation5], 4
      %s34 = int_to_ptr.vmem [resolvable:$true] %s33
      %39 = dma.hbm_to_vmem [thread:$0]  %s1, 8192, %s34, [#allocation6], 64, 64, 4
    $region9: #{tpu_custom_call.1} parent=1 // pred_fallthru
      _
    // Predicated region
    $region10: #{tpu_custom_call.1} parent=1 // pred_check
      _
    $region11: #{tpu_custom_call.1} parent=1 // pred_check_branch
      %41 = sbr.rel (0) target = $region13
    $region12: #{tpu_custom_call.1} parent=1 // pred_region
      _
    $region13: #{tpu_custom_call.1} parent=1 // pred_fallthru
      _
    // Predicated region
    $region14: #{tpu_custom_call.1} parent=1 // pred_check
      _
    $region15: #{tpu_custom_call.1} parent=1 // pred_check_branch
      %43 = sbr.rel (0) target = $region17
    $region16: #{tpu_custom_call.1} parent=1 // pred_region
      %s45 = ssub.s32 1024, 1024
      %46 = vsyncadd [#allocation6], %s45
      %s47 = sshll.u32 [#allocation7], 4
      %s48 = int_to_ptr.vmem [resolvable:$true] %s47
      %53 = dma.hbm_to_vmem [thread:$0]  %s3, 1024, %s48, [#allocation6], 64, 64, 4
    $region17: #{tpu_custom_call.1} parent=1 // pred_fallthru
      _
    // Predicated region
    $region18: #{tpu_custom_call.1} parent=1 // pred_check
      _
    $region19: #{tpu_custom_call.1} parent=1 // pred_check_branch
      %55 = sbr.rel (0) target = $region21
    $region20: #{tpu_custom_call.1} parent=1 // pred_region
      _
    $region21: #{tpu_custom_call.1} parent=1 // pred_fallthru
      _
    // Predicated region
    $region22: #{tpu_custom_call.1} parent=1 // pred_check
      _
    $region23: #{tpu_custom_call.1} parent=1 // pred_check_branch
      %57 = sbr.rel (0) target = $region25
    $region24: #{tpu_custom_call.1} parent=1 // pred_region
      %s59 = ssub.s32 1024, 1024
      %60 = vsyncadd [#allocation9], %s59
      %s61 = sshll.u32 [#allocation8], 4
      %s62 = int_to_ptr.vmem [resolvable:$true] %s61
      %67 = dma.hbm_to_vmem [thread:$0]  %s5, 1024, %s62, [#allocation9], 64, 64, 4
    $region25: #{tpu_custom_call.1} parent=1 // pred_fallthru
      _
    // Predicated region
    $region26: #{tpu_custom_call.1} parent=1 // pred_check
      _
    $region27: #{tpu_custom_call.1} parent=1 // pred_check_branch
      %69 = sbr.rel (0) target = $region29
    $region28: #{tpu_custom_call.1} parent=1 // pred_region
      _
    $region29: #{tpu_custom_call.1} parent=1 // pred_fallthru
      _
    // Predicated region
    $region30: #{tpu_custom_call.1} parent=1 // pred_check
      _
    $region31: #{tpu_custom_call.1} parent=1 // pred_check_branch
      %71 = sbr.rel (0) target = $region33
    $region32: #{tpu_custom_call.1} parent=1 // pred_region
      %72 = dma.done [#allocation3], 1024
    $region33: #{tpu_custom_call.1} parent=1 // pred_fallthru
      _
    // Predicated region
    $region34: #{tpu_custom_call.1} parent=1 // pred_check
      _
    $region35: #{tpu_custom_call.1} parent=1 // pred_check_branch
      %74 = sbr.rel (0) target = $region37
    $region36: #{tpu_custom_call.1} parent=1 // pred_region
      %75 = dma.done [#allocation6], 8192
    $region37: #{tpu_custom_call.1} parent=1 // pred_fallthru
      _
    // Predicated region
    $region38: #{tpu_custom_call.1} parent=1 // pred_check
      _
    $region39: #{tpu_custom_call.1} parent=1 // pred_check_branch
      %77 = sbr.rel (0) target = $region41
    $region40: #{tpu_custom_call.1} parent=1 // pred_region
      %78 = dma.done [#allocation6], 1024
    $region41: #{tpu_custom_call.1} parent=1 // pred_fallthru
      _
    // Predicated region
    $region42: #{tpu_custom_call.1} parent=1 // pred_check
      _
    $region43: #{tpu_custom_call.1} parent=1 // pred_check_branch
      %80 = sbr.rel (0) target = $region45
    $region44: #{tpu_custom_call.1} parent=1 // pred_region
      %81 = dma.done [#allocation9], 1024
    $region45: #{tpu_custom_call.1} parent=1 // pred_fallthru
      _
    %v83 = vld [vmem:[#allocation2] sm:$0xff]
    %v84 = vld [vmem:[#allocation2 + $0x8] sm:$0xff]
    %v85 = vld [vmem:[#allocation2 + $0x10] sm:$0xff]
    %v86 = vld [vmem:[#allocation2 + $0x18] sm:$0xff]
    %v87 = vld [vmem:[#allocation2 + $0x20] sm:$0xff]
    %v88 = vld [vmem:[#allocation2 + $0x28] sm:$0xff]
    %v89 = vld [vmem:[#allocation2 + $0x30] sm:$0xff]
    %v90 = vld [vmem:[#allocation2 + $0x38] sm:$0xff]
    %v91 = vld [vmem:[#allocation5] sm:$0xf]
    %v92 = vld [vmem:[#allocation5 + $0x4] sm:$0xf]
    %v93 = vld [vmem:[#allocation5 + $0x8] sm:$0xf]
    %v94 = vld [vmem:[#allocation5 + $0xc] sm:$0xf]
    %v95 = vld [vmem:[#allocation5 + $0x10] sm:$0xf]
    %v96 = vld [vmem:[#allocation5 + $0x14] sm:$0xf]
    %v97 = vld [vmem:[#allocation5 + $0x18] sm:$0xf]
    %v98 = vld [vmem:[#allocation5 + $0x1c] sm:$0xf]
    %v99 = vld [vmem:[#allocation5 + $0x20] sm:$0xf]
    %v100 = vld [vmem:[#allocation5 + $0x24] sm:$0xf]
    %v101 = vld [vmem:[#allocation5 + $0x28] sm:$0xf]
    %v102 = vld [vmem:[#allocation5 + $0x2c] sm:$0xf]
    %v103 = vld [vmem:[#allocation5 + $0x30] sm:$0xf]
    %v104 = vld [vmem:[#allocation5 + $0x34] sm:$0xf]
    %v105 = vld [vmem:[#allocation5 + $0x38] sm:$0xf]
    %v106 = vld [vmem:[#allocation5 + $0x3c] sm:$0xf]
    %v107 = vld [vmem:[#allocation5 + $0x40] sm:$0xf]
    %v108 = vld [vmem:[#allocation5 + $0x44] sm:$0xf]
    %v109 = vld [vmem:[#allocation5 + $0x48] sm:$0xf]
    %v110 = vld [vmem:[#allocation5 + $0x4c] sm:$0xf]
    %v111 = vld [vmem:[#allocation5 + $0x50] sm:$0xf]
    %v112 = vld [vmem:[#allocation5 + $0x54] sm:$0xf]
    %v113 = vld [vmem:[#allocation5 + $0x58] sm:$0xf]
    %v114 = vld [vmem:[#allocation5 + $0x5c] sm:$0xf]
    %v115 = vld [vmem:[#allocation5 + $0x60] sm:$0xf]
    %v116 = vld [vmem:[#allocation5 + $0x64] sm:$0xf]
    %v117 = vld [vmem:[#allocation5 + $0x68] sm:$0xf]
    %v118 = vld [vmem:[#allocation5 + $0x6c] sm:$0xf]
    %v119 = vld [vmem:[#allocation5 + $0x70] sm:$0xf]
    %v120 = vld [vmem:[#allocation5 + $0x74] sm:$0xf]
    %v121 = vld [vmem:[#allocation5 + $0x78] sm:$0xf]
    %v122 = vld [vmem:[#allocation5 + $0x7c] sm:$0xf]
    %v123 = vld [vmem:[#allocation5 + $0x80] sm:$0xf]
    %v124 = vld [vmem:[#allocation5 + $0x84] sm:$0xf]
    %v125 = vld [vmem:[#allocation5 + $0x88] sm:$0xf]
    %v126 = vld [vmem:[#allocation5 + $0x8c] sm:$0xf]
    %v127 = vld [vmem:[#allocation5 + $0x90] sm:$0xf]
    %v128 = vld [vmem:[#allocation5 + $0x94] sm:$0xf]
    %v129 = vld [vmem:[#allocation5 + $0x98] sm:$0xf]
    %v130 = vld [vmem:[#allocation5 + $0x9c] sm:$0xf]
    %v131 = vld [vmem:[#allocation5 + $0xa0] sm:$0xf]
    %v132 = vld [vmem:[#allocation5 + $0xa4] sm:$0xf]
    %v133 = vld [vmem:[#allocation5 + $0xa8] sm:$0xf]
    %v134 = vld [vmem:[#allocation5 + $0xac] sm:$0xf]
    %v135 = vld [vmem:[#allocation5 + $0xb0] sm:$0xf]
    %v136 = vld [vmem:[#allocation5 + $0xb4] sm:$0xf]
    %v137 = vld [vmem:[#allocation5 + $0xb8] sm:$0xf]
    %v138 = vld [vmem:[#allocation5 + $0xbc] sm:$0xf]
    %v139 = vld [vmem:[#allocation5 + $0xc0] sm:$0xf]
    %v140 = vld [vmem:[#allocation5 + $0xc4] sm:$0xf]
    %v141 = vld [vmem:[#allocation5 + $0xc8] sm:$0xf]
    %v142 = vld [vmem:[#allocation5 + $0xcc] sm:$0xf]
    %v143 = vld [vmem:[#allocation5 + $0xd0] sm:$0xf]
    %v144 = vld [vmem:[#allocation5 + $0xd4] sm:$0xf]
    %v145 = vld [vmem:[#allocation5 + $0xd8] sm:$0xf]
    %v146 = vld [vmem:[#allocation5 + $0xdc] sm:$0xf]
    %v147 = vld [vmem:[#allocation5 + $0xe0] sm:$0xf]
    %v148 = vld [vmem:[#allocation5 + $0xe4] sm:$0xf]
    %v149 = vld [vmem:[#allocation5 + $0xe8] sm:$0xf]
    %v150 = vld [vmem:[#allocation5 + $0xec] sm:$0xf]
    %v151 = vld [vmem:[#allocation5 + $0xf0] sm:$0xf]
    %v152 = vld [vmem:[#allocation5 + $0xf4] sm:$0xf]
    %v153 = vld [vmem:[#allocation5 + $0xf8] sm:$0xf]
    %v154 = vld [vmem:[#allocation5 + $0xfc] sm:$0xf]
    %v155 = vld [vmem:[#allocation5 + $0x100] sm:$0xf]
    %v156 = vld [vmem:[#allocation5 + $0x104] sm:$0xf]
    %v157 = vld [vmem:[#allocation5 + $0x108] sm:$0xf]
    %v158 = vld [vmem:[#allocation5 + $0x10c] sm:$0xf]
    %v159 = vld [vmem:[#allocation5 + $0x110] sm:$0xf]
    %v160 = vld [vmem:[#allocation5 + $0x114] sm:$0xf]
    %v161 = vld [vmem:[#allocation5 + $0x118] sm:$0xf]
    %v162 = vld [vmem:[#allocation5 + $0x11c] sm:$0xf]
    %v163 = vld [vmem:[#allocation5 + $0x120] sm:$0xf]
    %v164 = vld [vmem:[#allocation5 + $0x124] sm:$0xf]
    %v165 = vld [vmem:[#allocation5 + $0x128] sm:$0xf]
    %v166 = vld [vmem:[#allocation5 + $0x12c] sm:$0xf]
    %v167 = vld [vmem:[#allocation5 + $0x130] sm:$0xf]
    %v168 = vld [vmem:[#allocation5 + $0x134] sm:$0xf]
    %v169 = vld [vmem:[#allocation5 + $0x138] sm:$0xf]
    %v170 = vld [vmem:[#allocation5 + $0x13c] sm:$0xf]
    %v171 = vld [vmem:[#allocation5 + $0x140] sm:$0xf]
    %v172 = vld [vmem:[#allocation5 + $0x144] sm:$0xf]
    %v173 = vld [vmem:[#allocation5 + $0x148] sm:$0xf]
    %v174 = vld [vmem:[#allocation5 + $0x14c] sm:$0xf]
    %v175 = vld [vmem:[#allocation5 + $0x150] sm:$0xf]
    %v176 = vld [vmem:[#allocation5 + $0x154] sm:$0xf]
    %v177 = vld [vmem:[#allocation5 + $0x158] sm:$0xf]
    %v178 = vld [vmem:[#allocation5 + $0x15c] sm:$0xf]
    %v179 = vld [vmem:[#allocation5 + $0x160] sm:$0xf]
    %v180 = vld [vmem:[#allocation5 + $0x164] sm:$0xf]
    %v181 = vld [vmem:[#allocation5 + $0x168] sm:$0xf]
    %v182 = vld [vmem:[#allocation5 + $0x16c] sm:$0xf]
    %v183 = vld [vmem:[#allocation5 + $0x170] sm:$0xf]
    %v184 = vld [vmem:[#allocation5 + $0x174] sm:$0xf]
    %v185 = vld [vmem:[#allocation5 + $0x178] sm:$0xf]
    %v186 = vld [vmem:[#allocation5 + $0x17c] sm:$0xf]
    %v187 = vld [vmem:[#allocation5 + $0x180] sm:$0xf]
    %v188 = vld [vmem:[#allocation5 + $0x184] sm:$0xf]
    %v189 = vld [vmem:[#allocation5 + $0x188] sm:$0xf]
    %v190 = vld [vmem:[#allocation5 + $0x18c] sm:$0xf]
    %v191 = vld [vmem:[#allocation5 + $0x190] sm:$0xf]
    %v192 = vld [vmem:[#allocation5 + $0x194] sm:$0xf]
    %v193 = vld [vmem:[#allocation5 + $0x198] sm:$0xf]
    %v194 = vld [vmem:[#allocation5 + $0x19c] sm:$0xf]
    %v195 = vld [vmem:[#allocation5 + $0x1a0] sm:$0xf]
    %v196 = vld [vmem:[#allocation5 + $0x1a4] sm:$0xf]
    %v197 = vld [vmem:[#allocation5 + $0x1a8] sm:$0xf]
    %v198 = vld [vmem:[#allocation5 + $0x1ac] sm:$0xf]
    %v199 = vld [vmem:[#allocation5 + $0x1b0] sm:$0xf]
    %v200 = vld [vmem:[#allocation5 + $0x1b4] sm:$0xf]
    %v201 = vld [vmem:[#allocation5 + $0x1b8] sm:$0xf]
    %v202 = vld [vmem:[#allocation5 + $0x1bc] sm:$0xf]
    %v203 = vld [vmem:[#allocation5 + $0x1c0] sm:$0xf]
    %v204 = vld [vmem:[#allocation5 + $0x1c4] sm:$0xf]
    %v205 = vld [vmem:[#allocation5 + $0x1c8] sm:$0xf]
    %v206 = vld [vmem:[#allocation5 + $0x1cc] sm:$0xf]
    %v207 = vld [vmem:[#allocation5 + $0x1d0] sm:$0xf]
    %v208 = vld [vmem:[#allocation5 + $0x1d4] sm:$0xf]
    %v209 = vld [vmem:[#allocation5 + $0x1d8] sm:$0xf]
    %v210 = vld [vmem:[#allocation5 + $0x1dc] sm:$0xf]
    %v211 = vld [vmem:[#allocation5 + $0x1e0] sm:$0xf]
    %v212 = vld [vmem:[#allocation5 + $0x1e4] sm:$0xf]
    %v213 = vld [vmem:[#allocation5 + $0x1e8] sm:$0xf]
    %v214 = vld [vmem:[#allocation5 + $0x1ec] sm:$0xf]
    %v215 = vld [vmem:[#allocation5 + $0x1f0] sm:$0xf]
    %v216 = vld [vmem:[#allocation5 + $0x1f4] sm:$0xf]
    %v217 = vld [vmem:[#allocation5 + $0x1f8] sm:$0xf]
    %v218 = vld [vmem:[#allocation5 + $0x1fc] sm:$0xf]
    %v219 = vld [vmem:[%s2] sm:$0x1]
    %v221 = vlaneseq
    %v222 = vshrl.u32 %v221, 7
    %v223 = vsub.s32 0, %v222
    %v224 = vrot.slane %v219, %v223
    %v234 = vunpack.c.l.b16 %v83
    %v235 = vunpack.c.h.b16 %v83
    %v236 = vunpack.c.l.b16 %v84
    %v237 = vunpack.c.h.b16 %v84
    %v238 = vunpack.c.l.b16 %v85
    %v239 = vunpack.c.h.b16 %v85
    %v240 = vunpack.c.l.b16 %v86
    %v241 = vunpack.c.h.b16 %v86
    %v242 = vunpack.c.l.b16 %v87
    %v243 = vunpack.c.h.b16 %v87
    %v244 = vunpack.c.l.b16 %v88
    %v245 = vunpack.c.h.b16 %v88
    %v246 = vunpack.c.l.b16 %v89
    %v247 = vunpack.c.h.b16 %v89
    %v248 = vunpack.c.l.b16 %v90
    %v249 = vunpack.c.h.b16 %v90
    %v250 = vpack.c.b16 %v242, %v234
    %v251 = vpack.c.b16 %v243, %v235
    %v252 = vpack.c.b16 %v244, %v236
    %v253 = vpack.c.b16 %v245, %v237
    %v254 = vpack.c.b16 %v246, %v238
    %v255 = vpack.c.b16 %v247, %v239
    %v256 = vpack.c.b16 %v248, %v240
    %v257 = vpack.c.b16 %v249, %v241
    %v394 = vunpack.c.l.b16 %v91
    %v395 = vunpack.c.l.b16 %v92
    %v396 = vunpack.c.l.b16 %v93
    %v397 = vunpack.c.l.b16 %v94
    %v398 = vunpack.c.l.b16 %v95
    %v399 = vunpack.c.l.b16 %v96
    %v400 = vunpack.c.l.b16 %v97
    %v401 = vunpack.c.l.b16 %v98
    %v402 = vunpack.c.l.b16 %v99
    %v403 = vunpack.c.l.b16 %v100
    %v404 = vunpack.c.l.b16 %v101
    %v405 = vunpack.c.l.b16 %v102
    %v406 = vunpack.c.l.b16 %v103
    %v407 = vunpack.c.l.b16 %v104
    %v408 = vunpack.c.l.b16 %v105
    %v409 = vunpack.c.l.b16 %v106
    %v410 = vunpack.c.l.b16 %v107
    %v411 = vunpack.c.l.b16 %v108
    %v412 = vunpack.c.l.b16 %v109
    %v413 = vunpack.c.l.b16 %v110
    %v414 = vunpack.c.l.b16 %v111
    %v415 = vunpack.c.l.b16 %v112
    %v416 = vunpack.c.l.b16 %v113
    %v417 = vunpack.c.l.b16 %v114
    %v418 = vunpack.c.l.b16 %v115
    %v419 = vunpack.c.l.b16 %v116
    %v420 = vunpack.c.l.b16 %v117
    %v421 = vunpack.c.l.b16 %v118
    %v422 = vunpack.c.l.b16 %v119
    %v423 = vunpack.c.l.b16 %v120
    %v424 = vunpack.c.l.b16 %v121
    %v425 = vunpack.c.l.b16 %v122
    %v426 = vunpack.c.l.b16 %v123
    %v427 = vunpack.c.l.b16 %v124
    %v428 = vunpack.c.l.b16 %v125
    %v429 = vunpack.c.l.b16 %v126
    %v430 = vunpack.c.l.b16 %v127
    %v431 = vunpack.c.l.b16 %v128
    %v432 = vunpack.c.l.b16 %v129
    %v433 = vunpack.c.l.b16 %v130
    %v434 = vunpack.c.l.b16 %v131
    %v435 = vunpack.c.l.b16 %v132
    %v436 = vunpack.c.l.b16 %v133
    %v437 = vunpack.c.l.b16 %v134
    %v438 = vunpack.c.l.b16 %v135
    %v439 = vunpack.c.l.b16 %v136
    %v440 = vunpack.c.l.b16 %v137
    %v441 = vunpack.c.l.b16 %v138
    %v442 = vunpack.c.l.b16 %v139
    %v443 = vunpack.c.l.b16 %v140
    %v444 = vunpack.c.l.b16 %v141
    %v445 = vunpack.c.l.b16 %v142
    %v446 = vunpack.c.l.b16 %v143
    %v447 = vunpack.c.l.b16 %v144
    %v448 = vunpack.c.l.b16 %v145
    %v449 = vunpack.c.l.b16 %v146
    %v450 = vunpack.c.l.b16 %v147
    %v451 = vunpack.c.l.b16 %v148
    %v452 = vunpack.c.l.b16 %v149
    %v453 = vunpack.c.l.b16 %v150
    %v454 = vunpack.c.l.b16 %v151
    %v455 = vunpack.c.l.b16 %v152
    %v456 = vunpack.c.l.b16 %v153
    %v457 = vunpack.c.l.b16 %v154
    %v458 = vunpack.c.l.b16 %v155
    %v459 = vunpack.c.l.b16 %v156
    %v460 = vunpack.c.l.b16 %v157
    %v461 = vunpack.c.l.b16 %v158
    %v462 = vunpack.c.l.b16 %v159
    %v463 = vunpack.c.l.b16 %v160
    %v464 = vunpack.c.l.b16 %v161
    %v465 = vunpack.c.l.b16 %v162
    %v466 = vunpack.c.l.b16 %v163
    %v467 = vunpack.c.l.b16 %v164
    %v468 = vunpack.c.l.b16 %v165
    %v469 = vunpack.c.l.b16 %v166
    %v470 = vunpack.c.l.b16 %v167
    %v471 = vunpack.c.l.b16 %v168
    %v472 = vunpack.c.l.b16 %v169
    %v473 = vunpack.c.l.b16 %v170
    %v474 = vunpack.c.l.b16 %v171
    %v475 = vunpack.c.l.b16 %v172
    %v476 = vunpack.c.l.b16 %v173
    %v477 = vunpack.c.l.b16 %v174
    %v478 = vunpack.c.l.b16 %v175
    %v479 = vunpack.c.l.b16 %v176
    %v480 = vunpack.c.l.b16 %v177
    %v481 = vunpack.c.l.b16 %v178
    %v482 = vunpack.c.l.b16 %v179
    %v483 = vunpack.c.l.b16 %v180
    %v484 = vunpack.c.l.b16 %v181
    %v485 = vunpack.c.l.b16 %v182
    %v486 = vunpack.c.l.b16 %v183
    %v487 = vunpack.c.l.b16 %v184
    %v488 = vunpack.c.l.b16 %v185
    %v489 = vunpack.c.l.b16 %v186
    %v490 = vunpack.c.l.b16 %v187
    %v491 = vunpack.c.l.b16 %v188
    %v492 = vunpack.c.l.b16 %v189
    %v493 = vunpack.c.l.b16 %v190
    %v494 = vunpack.c.l.b16 %v191
    %v495 = vunpack.c.l.b16 %v192
    %v496 = vunpack.c.l.b16 %v193
    %v497 = vunpack.c.l.b16 %v194
    %v498 = vunpack.c.l.b16 %v195
    %v499 = vunpack.c.l.b16 %v196
    %v500 = vunpack.c.l.b16 %v197
    %v501 = vunpack.c.l.b16 %v198
    %v502 = vunpack.c.l.b16 %v199
    %v503 = vunpack.c.l.b16 %v200
    %v504 = vunpack.c.l.b16 %v201
    %v505 = vunpack.c.l.b16 %v202
    %v506 = vunpack.c.l.b16 %v203
    %v507 = vunpack.c.l.b16 %v204
    %v508 = vunpack.c.l.b16 %v205
    %v509 = vunpack.c.l.b16 %v206
    %v510 = vunpack.c.l.b16 %v207
    %v511 = vunpack.c.l.b16 %v208
    %v512 = vunpack.c.l.b16 %v209
    %v513 = vunpack.c.l.b16 %v210
    %v514 = vunpack.c.l.b16 %v211
    %v515 = vunpack.c.l.b16 %v212
    %v516 = vunpack.c.l.b16 %v213
    %v517 = vunpack.c.l.b16 %v214
    %v518 = vunpack.c.l.b16 %v215
    %v519 = vunpack.c.l.b16 %v216
    %v520 = vunpack.c.l.b16 %v217
    %v521 = vunpack.c.l.b16 %v218
    %v522 = vpack.c.b16 %v395, %v394
    %v523 = vpack.c.b16 %v397, %v396
    %v524 = vpack.c.b16 %v399, %v398
    %v525 = vpack.c.b16 %v401, %v400
    %v526 = vpack.c.b16 %v403, %v402
    %v527 = vpack.c.b16 %v405, %v404
    %v528 = vpack.c.b16 %v407, %v406
    %v529 = vpack.c.b16 %v409, %v408
    %v530 = vpack.c.b16 %v411, %v410
    %v531 = vpack.c.b16 %v413, %v412
    %v532 = vpack.c.b16 %v415, %v414
    %v533 = vpack.c.b16 %v417, %v416
    %v534 = vpack.c.b16 %v419, %v418
    %v535 = vpack.c.b16 %v421, %v420
    %v536 = vpack.c.b16 %v423, %v422
    %v537 = vpack.c.b16 %v425, %v424
    %v538 = vpack.c.b16 %v427, %v426
    %v539 = vpack.c.b16 %v429, %v428
    %v540 = vpack.c.b16 %v431, %v430
    %v541 = vpack.c.b16 %v433, %v432
    %v542 = vpack.c.b16 %v435, %v434
    %v543 = vpack.c.b16 %v437, %v436
    %v544 = vpack.c.b16 %v439, %v438
    %v545 = vpack.c.b16 %v441, %v440
    %v546 = vpack.c.b16 %v443, %v442
    %v547 = vpack.c.b16 %v445, %v444
    %v548 = vpack.c.b16 %v447, %v446
    %v549 = vpack.c.b16 %v449, %v448
    %v550 = vpack.c.b16 %v451, %v450
    %v551 = vpack.c.b16 %v453, %v452
    %v552 = vpack.c.b16 %v455, %v454
    %v553 = vpack.c.b16 %v457, %v456
    %v554 = vpack.c.b16 %v459, %v458
    %v555 = vpack.c.b16 %v461, %v460
    %v556 = vpack.c.b16 %v463, %v462
    %v557 = vpack.c.b16 %v465, %v464
    %v558 = vpack.c.b16 %v467, %v466
    %v559 = vpack.c.b16 %v469, %v468
    %v560 = vpack.c.b16 %v471, %v470
    %v561 = vpack.c.b16 %v473, %v472
    %v562 = vpack.c.b16 %v475, %v474
    %v563 = vpack.c.b16 %v477, %v476
    %v564 = vpack.c.b16 %v479, %v478
    %v565 = vpack.c.b16 %v481, %v480
    %v566 = vpack.c.b16 %v483, %v482
    %v567 = vpack.c.b16 %v485, %v484
    %v568 = vpack.c.b16 %v487, %v486
    %v569 = vpack.c.b16 %v489, %v488
    %v570 = vpack.c.b16 %v491, %v490
    %v571 = vpack.c.b16 %v493, %v492
    %v572 = vpack.c.b16 %v495, %v494
    %v573 = vpack.c.b16 %v497, %v496
    %v574 = vpack.c.b16 %v499, %v498
    %v575 = vpack.c.b16 %v501, %v500
    %v576 = vpack.c.b16 %v503, %v502
    %v577 = vpack.c.b16 %v505, %v504
    %v578 = vpack.c.b16 %v507, %v506
    %v579 = vpack.c.b16 %v509, %v508
    %v580 = vpack.c.b16 %v511, %v510
    %v581 = vpack.c.b16 %v513, %v512
    %v582 = vpack.c.b16 %v515, %v514
    %v583 = vpack.c.b16 %v517, %v516
    %v584 = vpack.c.b16 %v519, %v518
    %v585 = vpack.c.b16 %v521, %v520
    %650 = vmatprep.subr.bf16.mxu0 0
    %651 = vmatpush1.bf16.msra.mxu0 %v522
    %652 = vmatprep.subr.bf16.mxu0 0
    %653 = vmatpush1.bf16.msra.mxu0 %v523
    %654 = vmatprep.subr.bf16.mxu0 0
    %655 = vmatpush1.bf16.msra.mxu0 %v524
    %656 = vmatprep.subr.bf16.mxu0 0
    %657 = vmatpush1.bf16.msra.mxu0 %v525
    %658 = vmatprep.subr.bf16.mxu0 0
    %659 = vmatpush1.bf16.msra.mxu0 %v526
    %660 = vmatprep.subr.bf16.mxu0 0
    %661 = vmatpush1.bf16.msra.mxu0 %v527
    %662 = vmatprep.subr.bf16.mxu0 0
    %663 = vmatpush1.bf16.msra.mxu0 %v528
    %664 = vmatprep.subr.bf16.mxu0 0
    %665 = vmatpush1.bf16.msra.mxu0 %v529
    %666 = vmatprep.subr.bf16.mxu0 0
    %667 = vmatpush1.bf16.msra.mxu0 %v530
    %668 = vmatprep.subr.bf16.mxu0 0
    %669 = vmatpush1.bf16.msra.mxu0 %v531
    %670 = vmatprep.subr.bf16.mxu0 0
    %671 = vmatpush1.bf16.msra.mxu0 %v532
    %672 = vmatprep.subr.bf16.mxu0 0
    %673 = vmatpush1.bf16.msra.mxu0 %v533
    %674 = vmatprep.subr.bf16.mxu0 0
    %675 = vmatpush1.bf16.msra.mxu0 %v534
    %676 = vmatprep.subr.bf16.mxu0 0
    %677 = vmatpush1.bf16.msra.mxu0 %v535
    %678 = vmatprep.subr.bf16.mxu0 0
    %679 = vmatpush1.bf16.msra.mxu0 %v536
    %680 = vmatprep.subr.bf16.mxu0 0
    %681 = vmatpush1.bf16.msra.mxu0 %v537
    %682 = vmatprep.mubr.bf16.mxu0 %v251
    %683 = vmatmul.mubr.bf16.gmra.mrb[0].mxu0 %v250
    %v684 = vpop.f32.mrb[0].mxu0
    %v685 = vadd.f32 %v224, %v684
    %v686 = vpop.f32.mrb[0].mxu0
    %v687 = vpop.f32.mrb[0].mxu0
    %v688 = vadd.f32 %v224, %v687
    %v689 = vpop.f32.mrb[0].mxu0
    %690 = vdwg.mxu0
    %691 = vmatprep.subr.bf16.mxu0 0
    %692 = vmatpush1.bf16.msra.mxu0 %v538
    %693 = vmatprep.subr.bf16.mxu0 0
    %694 = vmatpush1.bf16.msra.mxu0 %v539
    %695 = vmatprep.subr.bf16.mxu0 0
    %696 = vmatpush1.bf16.msra.mxu0 %v540
    %697 = vmatprep.subr.bf16.mxu0 0
    %698 = vmatpush1.bf16.msra.mxu0 %v541
    %699 = vmatprep.subr.bf16.mxu0 0
    %700 = vmatpush1.bf16.msra.mxu0 %v542
    %701 = vmatprep.subr.bf16.mxu0 0
    %702 = vmatpush1.bf16.msra.mxu0 %v543
    %703 = vmatprep.subr.bf16.mxu0 0
    %704 = vmatpush1.bf16.msra.mxu0 %v544
    %705 = vmatprep.subr.bf16.mxu0 0
    %706 = vmatpush1.bf16.msra.mxu0 %v545
    %707 = vmatprep.subr.bf16.mxu0 0
    %708 = vmatpush1.bf16.msra.mxu0 %v546
    %709 = vmatprep.subr.bf16.mxu0 0
    %710 = vmatpush1.bf16.msra.mxu0 %v547
    %711 = vmatprep.subr.bf16.mxu0 0
    %712 = vmatpush1.bf16.msra.mxu0 %v548
    %713 = vmatprep.subr.bf16.mxu0 0
    %714 = vmatpush1.bf16.msra.mxu0 %v549
    %715 = vmatprep.subr.bf16.mxu0 0
    %716 = vmatpush1.bf16.msra.mxu0 %v550
    %717 = vmatprep.subr.bf16.mxu0 0
    %718 = vmatpush1.bf16.msra.mxu0 %v551
    %719 = vmatprep.subr.bf16.mxu0 0
    %720 = vmatpush1.bf16.msra.mxu0 %v552
    %721 = vmatprep.subr.bf16.mxu0 0
    %722 = vmatpush1.bf16.msra.mxu0 %v553
    %723 = vmatprep.mubr.bf16.mxu0 %v253
    %724 = vmatmul.mubr.bf16.gmra.mrb[0].mxu0 %v252
    %v725 = vpop.f32.mrb[0].mxu0
    %v726 = vadd.f32 %v685, %v725
    %v727 = vpop.f32.mrb[0].mxu0
    %v728 = vpop.f32.mrb[0].mxu0
    %v729 = vadd.f32 %v688, %v728
    %v730 = vpop.f32.mrb[0].mxu0
    %731 = vdwg.mxu0
    %732 = vmatprep.subr.bf16.mxu0 0
    %733 = vmatpush1.bf16.msra.mxu0 %v554
    %734 = vmatprep.subr.bf16.mxu0 0
    %735 = vmatpush1.bf16.msra.mxu0 %v555
    %736 = vmatprep.subr.bf16.mxu0 0
    %737 = vmatpush1.bf16.msra.mxu0 %v556
    %738 = vmatprep.subr.bf16.mxu0 0
    %739 = vmatpush1.bf16.msra.mxu0 %v557
    %740 = vmatprep.subr.bf16.mxu0 0
    %741 = vmatpush1.bf16.msra.mxu0 %v558
    %742 = vmatprep.subr.bf16.mxu0 0
    %743 = vmatpush1.bf16.msra.mxu0 %v559
    %744 = vmatprep.subr.bf16.mxu0 0
    %745 = vmatpush1.bf16.msra.mxu0 %v560
    %746 = vmatprep.subr.bf16.mxu0 0
    %747 = vmatpush1.bf16.msra.mxu0 %v561
    %748 = vmatprep.subr.bf16.mxu0 0
    %749 = vmatpush1.bf16.msra.mxu0 %v562
    %750 = vmatprep.subr.bf16.mxu0 0
    %751 = vmatpush1.bf16.msra.mxu0 %v563
    %752 = vmatprep.subr.bf16.mxu0 0
    %753 = vmatpush1.bf16.msra.mxu0 %v564
    %754 = vmatprep.subr.bf16.mxu0 0
    %755 = vmatpush1.bf16.msra.mxu0 %v565
    %756 = vmatprep.subr.bf16.mxu0 0
    %757 = vmatpush1.bf16.msra.mxu0 %v566
    %758 = vmatprep.subr.bf16.mxu0 0
    %759 = vmatpush1.bf16.msra.mxu0 %v567
    %760 = vmatprep.subr.bf16.mxu0 0
    %761 = vmatpush1.bf16.msra.mxu0 %v568
    %762 = vmatprep.subr.bf16.mxu0 0
    %763 = vmatpush1.bf16.msra.mxu0 %v569
    %764 = vmatprep.mubr.bf16.mxu0 %v255
    %765 = vmatmul.mubr.bf16.gmra.mrb[0].mxu0 %v254
    %v766 = vpop.f32.mrb[0].mxu0
    %v767 = vadd.f32 %v726, %v766
    %v768 = vpop.f32.mrb[0].mxu0
    %v769 = vpop.f32.mrb[0].mxu0
    %v770 = vadd.f32 %v729, %v769
    %v771 = vpop.f32.mrb[0].mxu0
    %772 = vdwg.mxu0
    %773 = vmatprep.subr.bf16.mxu0 0
    %774 = vmatpush1.bf16.msra.mxu0 %v570
    %775 = vmatprep.subr.bf16.mxu0 0
    %776 = vmatpush1.bf16.msra.mxu0 %v571
    %777 = vmatprep.subr.bf16.mxu0 0
    %778 = vmatpush1.bf16.msra.mxu0 %v572
    %779 = vmatprep.subr.bf16.mxu0 0
    %780 = vmatpush1.bf16.msra.mxu0 %v573
    %781 = vmatprep.subr.bf16.mxu0 0
    %782 = vmatpush1.bf16.msra.mxu0 %v574
    %783 = vmatprep.subr.bf16.mxu0 0
    %784 = vmatpush1.bf16.msra.mxu0 %v575
    %785 = vmatprep.subr.bf16.mxu0 0
    %786 = vmatpush1.bf16.msra.mxu0 %v576
    %787 = vmatprep.subr.bf16.mxu0 0
    %788 = vmatpush1.bf16.msra.mxu0 %v577
    %789 = vmatprep.subr.bf16.mxu0 0
    %790 = vmatpush1.bf16.msra.mxu0 %v578
    %791 = vmatprep.subr.bf16.mxu0 0
    %792 = vmatpush1.bf16.msra.mxu0 %v579
    %793 = vmatprep.subr.bf16.mxu0 0
    %794 = vmatpush1.bf16.msra.mxu0 %v580
    %795 = vmatprep.subr.bf16.mxu0 0
    %796 = vmatpush1.bf16.msra.mxu0 %v581
    %797 = vmatprep.subr.bf16.mxu0 0
    %798 = vmatpush1.bf16.msra.mxu0 %v582
    %799 = vmatprep.subr.bf16.mxu0 0
    %800 = vmatpush1.bf16.msra.mxu0 %v583
    %801 = vmatprep.subr.bf16.mxu0 0
    %802 = vmatpush1.bf16.msra.mxu0 %v584
    %803 = vmatprep.subr.bf16.mxu0 0
    %804 = vmatpush1.bf16.msra.mxu0 %v585
    %805 = vmatprep.mubr.bf16.mxu0 %v257
    %806 = vmatmul.mubr.bf16.gmra.mrb[0].mxu0 %v256
    %v807 = vpop.f32.mrb[0].mxu0
    %v808 = vadd.f32 %v767, %v807
    %v809 = vpop.f32.mrb[0].mxu0
    %v810 = vpop.f32.mrb[0].mxu0
    %v811 = vadd.f32 %v770, %v810
    %v812 = vpop.f32.mrb[0].mxu0
    %813 = vdwg.mxu0
    %v814 = vmax.f32 %v808, 0.0
    %v815 = vmax.f32 %v811, 0.0
    %v816 = vpack.c.bf16 %v815, %v814
    %v817 = vld [vmem:[#allocation7] sm:$0xf]
    %v818 = vld [vmem:[#allocation7 + $0x4] sm:$0xf]
    %v819 = vld [vmem:[#allocation7 + $0x8] sm:$0xf]
    %v820 = vld [vmem:[#allocation7 + $0xc] sm:$0xf]
    %v821 = vld [vmem:[#allocation7 + $0x10] sm:$0xf]
    %v822 = vld [vmem:[#allocation7 + $0x14] sm:$0xf]
    %v823 = vld [vmem:[#allocation7 + $0x18] sm:$0xf]
    %v824 = vld [vmem:[#allocation7 + $0x1c] sm:$0xf]
    %v825 = vld [vmem:[#allocation7 + $0x20] sm:$0xf]
    %v826 = vld [vmem:[#allocation7 + $0x24] sm:$0xf]
    %v827 = vld [vmem:[#allocation7 + $0x28] sm:$0xf]
    %v828 = vld [vmem:[#allocation7 + $0x2c] sm:$0xf]
    %v829 = vld [vmem:[#allocation7 + $0x30] sm:$0xf]
    %v830 = vld [vmem:[#allocation7 + $0x34] sm:$0xf]
    %v831 = vld [vmem:[#allocation7 + $0x38] sm:$0xf]
    %v832 = vld [vmem:[#allocation7 + $0x3c] sm:$0xf]
    %v833 = vld [vmem:[%s4] sm:$0x1]
    %v835 = vlaneseq
    %v836 = vshrl.u32 %v835, 7
    %v837 = vsub.s32 0, %v836
    %v838 = vrot.slane %v833, %v837
    %v856 = vunpack.c.l.b16 %v817
    %v857 = vunpack.c.l.b16 %v818
    %v858 = vunpack.c.l.b16 %v819
    %v859 = vunpack.c.l.b16 %v820
    %v860 = vunpack.c.l.b16 %v821
    %v861 = vunpack.c.l.b16 %v822
    %v862 = vunpack.c.l.b16 %v823
    %v863 = vunpack.c.l.b16 %v824
    %v864 = vunpack.c.l.b16 %v825
    %v865 = vunpack.c.l.b16 %v826
    %v866 = vunpack.c.l.b16 %v827
    %v867 = vunpack.c.l.b16 %v828
    %v868 = vunpack.c.l.b16 %v829
    %v869 = vunpack.c.l.b16 %v830
    %v870 = vunpack.c.l.b16 %v831
    %v871 = vunpack.c.l.b16 %v832
    %v872 = vpack.c.b16 %v857, %v856
    %v873 = vpack.c.b16 %v859, %v858
    %v874 = vpack.c.b16 %v861, %v860
    %v875 = vpack.c.b16 %v863, %v862
    %v876 = vpack.c.b16 %v865, %v864
    %v877 = vpack.c.b16 %v867, %v866
    %v878 = vpack.c.b16 %v869, %v868
    %v879 = vpack.c.b16 %v871, %v870
    %888 = vmatprep.subr.bf16.mxu0 0
    %889 = vmatpush1.bf16.msra.mxu0 %v872
    %890 = vmatprep.subr.bf16.mxu0 0
    %891 = vmatpush1.bf16.msra.mxu0 %v873
    %892 = vmatprep.subr.bf16.mxu0 0
    %893 = vmatpush1.bf16.msra.mxu0 %v874
    %894 = vmatprep.subr.bf16.mxu0 0
    %895 = vmatpush1.bf16.msra.mxu0 %v875
    %896 = vmatprep.subr.bf16.mxu0 0
    %897 = vmatpush1.bf16.msra.mxu0 %v876
    %898 = vmatprep.subr.bf16.mxu0 0
    %899 = vmatpush1.bf16.msra.mxu0 %v877
    %900 = vmatprep.subr.bf16.mxu0 0
    %901 = vmatpush1.bf16.msra.mxu0 %v878
    %902 = vmatprep.subr.bf16.mxu0 0
    %903 = vmatpush1.bf16.msra.mxu0 %v879
    %904 = vmatprep.subr.bf16.mxu0 0
    %905 = vmatpush1.bf16.msra.mxu0 0
    %906 = vmatprep.subr.bf16.mxu0 0
    %907 = vmatpush1.bf16.msra.mxu0 0
    %908 = vmatprep.subr.bf16.mxu0 0
    %909 = vmatpush1.bf16.msra.mxu0 0
    %910 = vmatprep.subr.bf16.mxu0 0
    %911 = vmatpush1.bf16.msra.mxu0 0
    %912 = vmatprep.subr.bf16.mxu0 0
    %913 = vmatpush1.bf16.msra.mxu0 0
    %914 = vmatprep.subr.bf16.mxu0 0
    %915 = vmatpush1.bf16.msra.mxu0 0
    %916 = vmatprep.subr.bf16.mxu0 0
    %917 = vmatpush1.bf16.msra.mxu0 0
    %918 = vmatprep.subr.bf16.mxu0 0
    %919 = vmatpush1.bf16.msra.mxu0 0
    %920 = vmatprep.mubr.bf16.mxu0 0
    %921 = vmatmul.mubr.bf16.gmra.mrb[0].mxu0 %v816
    %v922 = vpop.f32.mrb[0].mxu0
    %v923 = vadd.f32 %v838, %v922
    %v924 = vpop.f32.mrb[0].mxu0
    %v925 = vpop.f32.mrb[0].mxu0
    %v926 = vadd.f32 %v838, %v925
    %v927 = vpop.f32.mrb[0].mxu0
    %928 = vdwg.mxu0
    %v929 = vmax.f32 %v923, 0.0
    %v930 = vmax.f32 %v926, 0.0
    %v931 = vpack.c.bf16 %v930, %v929
    %v932 = vld [vmem:[#allocation8] sm:$0xf]
    %v933 = vld [vmem:[#allocation8 + $0x4] sm:$0xf]
    %v934 = vld [vmem:[#allocation8 + $0x8] sm:$0xf]
    %v935 = vld [vmem:[#allocation8 + $0xc] sm:$0xf]
    %v936 = vld [vmem:[#allocation8 + $0x10] sm:$0xf]
    %v937 = vld [vmem:[#allocation8 + $0x14] sm:$0xf]
    %v938 = vld [vmem:[#allocation8 + $0x18] sm:$0xf]
    %v939 = vld [vmem:[#allocation8 + $0x1c] sm:$0xf]
    %v940 = vld [vmem:[#allocation8 + $0x20] sm:$0xf]
    %v941 = vld [vmem:[#allocation8 + $0x24] sm:$0xf]
    %v942 = vld [vmem:[#allocation8 + $0x28] sm:$0xf]
    %v943 = vld [vmem:[#allocation8 + $0x2c] sm:$0xf]
    %v944 = vld [vmem:[#allocation8 + $0x30] sm:$0xf]
    %v945 = vld [vmem:[#allocation8 + $0x34] sm:$0xf]
    %v946 = vld [vmem:[#allocation8 + $0x38] sm:$0xf]
    %v947 = vld [vmem:[#allocation8 + $0x3c] sm:$0xf]
    %v948 = vld [vmem:[%s6] sm:$0x1]
    %v950 = vlaneseq
    %v951 = vshrl.u32 %v950, 7
    %v952 = vsub.s32 0, %v951
    %v953 = vrot.slane %v948, %v952
    %v971 = vunpack.c.l.b16 %v932
    %v972 = vunpack.c.l.b16 %v933
    %v973 = vunpack.c.l.b16 %v934
    %v974 = vunpack.c.l.b16 %v935
    %v975 = vunpack.c.l.b16 %v936
    %v976 = vunpack.c.l.b16 %v937
    %v977 = vunpack.c.l.b16 %v938
    %v978 = vunpack.c.l.b16 %v939
    %v979 = vunpack.c.l.b16 %v940
    %v980 = vunpack.c.l.b16 %v941
    %v981 = vunpack.c.l.b16 %v942
    %v982 = vunpack.c.l.b16 %v943
    %v983 = vunpack.c.l.b16 %v944
    %v984 = vunpack.c.l.b16 %v945
    %v985 = vunpack.c.l.b16 %v946
    %v986 = vunpack.c.l.b16 %v947
    %v987 = vpack.c.b16 %v972, %v971
    %v988 = vpack.c.b16 %v974, %v973
    %v989 = vpack.c.b16 %v976, %v975
    %v990 = vpack.c.b16 %v978, %v977
    %v991 = vpack.c.b16 %v980, %v979
    %v992 = vpack.c.b16 %v982, %v981
    %v993 = vpack.c.b16 %v984, %v983
    %v994 = vpack.c.b16 %v986, %v985
    %1003 = vmatprep.subr.bf16.mxu0 0
    %1004 = vmatpush1.bf16.msra.mxu0 %v987
    %1005 = vmatprep.subr.bf16.mxu0 0
    %1006 = vmatpush1.bf16.msra.mxu0 %v988
    %1007 = vmatprep.subr.bf16.mxu0 0
    %1008 = vmatpush1.bf16.msra.mxu0 %v989
    %1009 = vmatprep.subr.bf16.mxu0 0
    %1010 = vmatpush1.bf16.msra.mxu0 %v990
    %1011 = vmatprep.subr.bf16.mxu0 0
    %1012 = vmatpush1.bf16.msra.mxu0 %v991
    %1013 = vmatprep.subr.bf16.mxu0 0
    %1014 = vmatpush1.bf16.msra.mxu0 %v992
    %1015 = vmatprep.subr.bf16.mxu0 0
    %1016 = vmatpush1.bf16.msra.mxu0 %v993
    %1017 = vmatprep.subr.bf16.mxu0 0
    %1018 = vmatpush1.bf16.msra.mxu0 %v994
    %1019 = vmatprep.subr.bf16.mxu0 0
    %1020 = vmatpush1.bf16.msra.mxu0 0
    %1021 = vmatprep.subr.bf16.mxu0 0
    %1022 = vmatpush1.bf16.msra.mxu0 0
    %1023 = vmatprep.subr.bf16.mxu0 0
    %1024 = vmatpush1.bf16.msra.mxu0 0
    %1025 = vmatprep.subr.bf16.mxu0 0
    %1026 = vmatpush1.bf16.msra.mxu0 0
    %1027 = vmatprep.subr.bf16.mxu0 0
    %1028 = vmatpush1.bf16.msra.mxu0 0
    %1029 = vmatprep.subr.bf16.mxu0 0
    %1030 = vmatpush1.bf16.msra.mxu0 0
    %1031 = vmatprep.subr.bf16.mxu0 0
    %1032 = vmatpush1.bf16.msra.mxu0 0
    %1033 = vmatprep.subr.bf16.mxu0 0
    %1034 = vmatpush1.bf16.msra.mxu0 0
    %1035 = vmatprep.mubr.bf16.mxu0 0
    %1036 = vmatmul.mubr.bf16.gmra.mrb[0].mxu0 %v931
    %v1037 = vpop.f32.mrb[0].mxu0
    %v1038 = vadd.f32 %v953, %v1037
    %v1039 = vpop.f32.mrb[0].mxu0
    %v1040 = vpop.f32.mrb[0].mxu0
    %v1041 = vadd.f32 %v953, %v1040
    %v1042 = vpop.f32.mrb[0].mxu0
    %1043 = vdwg.mxu0
    %v1044 = vlaneseq
    %v1045 = vand.u32 %v1044, 127
    %vm1046 = vcmp.lt.s32.totalorder %v1045, 10
    %v1047 = vsel %vm1046, %v1038, -1e+30
    %v1048 = vsel %vm1046, %v1041, -1e+30
    %1049 = vmax.xlane.f32.xlu0 %v1047
    %v1050 = vpop.xlane.xlu0 %1049
    %1051 = vmax.xlane.f32.xlu0 %v1048
    %v1052 = vpop.xlane.xlu0 %1051
    %v1053 = vsub.f32 %v1047, %v1050
    %v1054 = vsub.f32 %v1048, %v1052
    %v1055 = vmul.f32 %v1053, 1.442695
    %v1056 = vpow.pop %v1055
    %v1057 = vmul.f32 %v1054, 1.442695
    %v1058 = vpow.pop %v1057
    %1059 = vadd.xlane.f32.xlu0 %v1056
    %v1060 = vpop.xlane.xlu0 %1059
    %1061 = vadd.xlane.f32.xlu0 %v1058
    %v1062 = vpop.xlane.xlu0 %1061
    %v1063 = vlog2.pop %v1060
    %v1064 = vmul.f32 %v1063, 0.6931472
    %v1065 = vlog2.pop %v1062
    %v1066 = vmul.f32 %v1065, 0.6931472
    %v1067 = vsub.f32 %v1053, %v1064
    %v1068 = vsub.f32 %v1054, %v1066
    %1069 = vst [vmem:[#allocation10] sm:$0xff] %v1067
    %1070 = vst [vmem:[#allocation10 + $0x8] sm:$0xff] %v1068
    // Predicated region
    $region46: #{tpu_custom_call.1} parent=1 // pred_check
      _
    $region47: #{tpu_custom_call.1} parent=1 // pred_check_branch
      %1072 = sbr.rel (0) target = $region49
    $region48: #{tpu_custom_call.1} parent=1 // pred_region
      %s1074 = ssub.s32 256, 256
      %1075 = vsyncadd [#allocation4], %s1074
      %s1076 = sshll.u32 [#allocation10], 4
      %s1077 = int_to_ptr.vmem [resolvable:$true] %s1076
      %1082 = dma.vmem_to_hbm [thread:$0]  %s1077, 256, %s7, [#allocation4], 128, 128, 8
    $region49: #{tpu_custom_call.1} parent=1 // pred_fallthru
      _
    // Predicated region
    $region50: #{tpu_custom_call.1} parent=1 // pred_check
      _
    $region51: #{tpu_custom_call.1} parent=1 // pred_check_branch
      %1084 = sbr.rel (0) target = $region53
    $region52: #{tpu_custom_call.1} parent=1 // pred_region
      %1085 = dma.done [#allocation4], 256
    $region53: #{tpu_custom_call.1} parent=1 // pred_fallthru
      _
    %1086 = vsyncpa [#allocation3], 1
    %1087 = vsyncpa [#allocation6], 1
    %1088 = vsyncpa [#allocation9], 1
    %1089 = vsyncpa [#allocation4], 1

// kernel: tpu_custom_call.1
$region0: #{tpu_custom_call.1}
  #allocation0 [shape = 'u32[]', space=smem, size = 0x4, offset = 0x4, fixed_abs, tag = 'smem constant byte address 0x4 - core index']
  #allocation1 [shape = 'u32[144,128]{1,0:T(1,128)}', space=vmem, size = 0x12000, scoped, tag = 'internal scratch']
  %s0 = inlined_call_operand.hbm [shape: bf16[16,1024], index: 0, kind: input, shape index: {}]
  %s1 = inlined_call_operand.hbm [shape: bf16[1024,128], index: 1, kind: input, shape index: {}]
  %s2 = inlined_call_operand.vmem [shape: f32[1,128], index: 2, kind: input, shape index: {}]
  %s3 = inlined_call_operand.hbm [shape: bf16[128,128], index: 3, kind: input, shape index: {}]
  %s4 = inlined_call_operand.vmem [shape: f32[1,128], index: 4, kind: input, shape index: {}]
  %s5 = inlined_call_operand.hbm [shape: bf16[128,128], index: 5, kind: input, shape index: {}]
  %s6 = inlined_call_operand.vmem [shape: f32[1,128], index: 6, kind: input, shape index: {}]
  %s7 = inlined_call_operand.hbm [shape: f32[16,128], index: 7, kind: output, shape index: {}]
  %s8 = sld [smem:[#allocation0]]
  $region54: #{tpu_custom_call.1} parent=0
    _
  %s10 = ssub.s32 1, %s8
  %s11 = scalar_select 0, %s10, %s8
  $region1: #{tpu_custom_call.1} parent=0
    #allocation2 [shape = 'u8[32768]{0}', space=vmem, size = 0x8000, scoped, tag = 'input window, operand 0, single buffered']
    #allocation3 [shape = 's32[1]{0}', space=sflag, size = 0x4, scoped, tag = 'scoped memory for tpu_custom_call.1']
    #allocation4 [shape = 's32[1]{0}', space=sflag, size = 0x4, scoped, tag = 'scoped memory for tpu_custom_call.1']
    #allocation5 [shape = 'u8[262144]{0}', space=vmem, size = 0x40000, scoped, tag = 'input window, operand 1, single buffered']
    #allocation6 [shape = 's32[1]{0}', space=sflag, size = 0x4, scoped, tag = 'scoped memory for tpu_custom_call.1']
    #allocation7 [shape = 'u8[32768]{0}', space=vmem, size = 0x8000, scoped, tag = 'input window, operand 3, single buffered']
    #allocation8 [shape = 'u8[32768]{0}', space=vmem, size = 0x8000, scoped, tag = 'input window, operand 5, single buffered']
    #allocation9 [shape = 's32[1]{0}', space=sflag, size = 0x4, scoped, tag = 'scoped memory for tpu_custom_call.1']
    #allocation10 [shape = 'u8[8192]{0}', space=vmem, size = 0x2000, scoped, tag = 'output window, operand 0, single buffered']
    %12 = vsyncpa [#allocation3], 0
    %13 = vsyncpa [#allocation6], 0
    %14 = vsyncpa [#allocation9], 0
    %15 = vsyncpa [#allocation4], 0
    // Predicated region
    $region2: #{tpu_custom_call.1} parent=1 // pred_check
      _
    $region3: #{tpu_custom_call.1} parent=1 // pred_check_branch
      %17 = sbr.rel (0) target = $region5
    $region4: #{tpu_custom_call.1} parent=1 // pred_region
      %s19 = ssub.s32 1024, 1024
      %20 = vsyncadd [#allocation3], %s19
      %s21 = sshll.u32 [#allocation2], 4
      %s22 = int_to_ptr.vmem [resolvable:$true] %s21
      %27 = dma.hbm_to_vmem [thread:$0]  %s0, 1024, %s22, [#allocation3], 512, 512, 32
    $region5: #{tpu_custom_call.1} parent=1 // pred_fallthru
      _
    // Predicated region
    $region6: #{tpu_custom_call.1} parent=1 // pred_check
      _
    $region7: #{tpu_custom_call.1} parent=1 // pred_check_branch
      %29 = sbr.rel (0) target = $region9
    $region8: #{tpu_custom_call.1} parent=1 // pred_region
      %s31 = ssub.s32 8192, 8192
      %32 = vsyncadd [#allocation6], %s31
      %s33 = sshll.u32 [#allocation5], 4
      %s34 = int_to_ptr.vmem [resolvable:$true] %s33
      %39 = dma.hbm_to_vmem [thread:$0]  %s1, 8192, %s34, [#allocation6], 64, 64, 4
    $region9: #{tpu_custom_call.1} parent=1 // pred_fallthru
      _
    // Predicated region
    $region10: #{tpu_custom_call.1} parent=1 // pred_check
      _
    $region11: #{tpu_custom_call.1} parent=1 // pred_check_branch
      %41 = sbr.rel (0) target = $region13
    $region12: #{tpu_custom_call.1} parent=1 // pred_region
      _
    $region13: #{tpu_custom_call.1} parent=1 // pred_fallthru
      _
    // Predicated region
    $region14: #{tpu_custom_call.1} parent=1 // pred_check
      _
    $region15: #{tpu_custom_call.1} parent=1 // pred_check_branch
      %43 = sbr.rel (0) target = $region17
    $region16: #{tpu_custom_call.1} parent=1 // pred_region
      %s45 = ssub.s32 1024, 1024
      %46 = vsyncadd [#allocation6], %s45
      %s47 = sshll.u32 [#allocation7], 4
      %s48 = int_to_ptr.vmem [resolvable:$true] %s47
      %53 = dma.hbm_to_vmem [thread:$0]  %s3, 1024, %s48, [#allocation6], 64, 64, 4
    $region17: #{tpu_custom_call.1} parent=1 // pred_fallthru
      _
    // Predicated region
    $region18: #{tpu_custom_call.1} parent=1 // pred_check
      _
    $region19: #{tpu_custom_call.1} parent=1 // pred_check_branch
      %55 = sbr.rel (0) target = $region21
    $region20: #{tpu_custom_call.1} parent=1 // pred_region
      _
    $region21: #{tpu_custom_call.1} parent=1 // pred_fallthru
      _
    // Predicated region
    $region22: #{tpu_custom_call.1} parent=1 // pred_check
      _
    $region23: #{tpu_custom_call.1} parent=1 // pred_check_branch
      %57 = sbr.rel (0) target = $region25
    $region24: #{tpu_custom_call.1} parent=1 // pred_region
      %s59 = ssub.s32 1024, 1024
      %60 = vsyncadd [#allocation9], %s59
      %s61 = sshll.u32 [#allocation8], 4
      %s62 = int_to_ptr.vmem [resolvable:$true] %s61
      %67 = dma.hbm_to_vmem [thread:$0]  %s5, 1024, %s62, [#allocation9], 64, 64, 4
    $region25: #{tpu_custom_call.1} parent=1 // pred_fallthru
      _
    // Predicated region
    $region26: #{tpu_custom_call.1} parent=1 // pred_check
      _
    $region27: #{tpu_custom_call.1} parent=1 // pred_check_branch
      %69 = sbr.rel (0) target = $region29
    $region28: #{tpu_custom_call.1} parent=1 // pred_region
      _
    $region29: #{tpu_custom_call.1} parent=1 // pred_fallthru
      _
    // Predicated region
    $region30: #{tpu_custom_call.1} parent=1 // pred_check
      _
    $region31: #{tpu_custom_call.1} parent=1 // pred_check_branch
      %71 = sbr.rel (0) target = $region33
    $region32: #{tpu_custom_call.1} parent=1 // pred_region
      %72 = dma.done [#allocation3], 1024
    $region33: #{tpu_custom_call.1} parent=1 // pred_fallthru
      _
    // Predicated region
    $region34: #{tpu_custom_call.1} parent=1 // pred_check
      _
    $region35: #{tpu_custom_call.1} parent=1 // pred_check_branch
      %74 = sbr.rel (0) target = $region37
    $region36: #{tpu_custom_call.1} parent=1 // pred_region
      %75 = dma.done [#allocation6], 8192
    $region37: #{tpu_custom_call.1} parent=1 // pred_fallthru
      _
    // Predicated region
    $region38: #{tpu_custom_call.1} parent=1 // pred_check
      _
    $region39: #{tpu_custom_call.1} parent=1 // pred_check_branch
      %77 = sbr.rel (0) target = $region41
    $region40: #{tpu_custom_call.1} parent=1 // pred_region
      %78 = dma.done [#allocation6], 1024
    $region41: #{tpu_custom_call.1} parent=1 // pred_fallthru
      _
    // Predicated region
    $region42: #{tpu_custom_call.1} parent=1 // pred_check
      _
    $region43: #{tpu_custom_call.1} parent=1 // pred_check_branch
      %80 = sbr.rel (0) target = $region45
    $region44: #{tpu_custom_call.1} parent=1 // pred_region
      %81 = dma.done [#allocation9], 1024
    $region45: #{tpu_custom_call.1} parent=1 // pred_fallthru
      _
    %v83 = vld [vmem:[#allocation2] sm:$0xff]
    %v84 = vld [vmem:[#allocation2 + $0x8] sm:$0xff]
    %v85 = vld [vmem:[#allocation2 + $0x10] sm:$0xff]
    %v86 = vld [vmem:[#allocation2 + $0x18] sm:$0xff]
    %v87 = vld [vmem:[#allocation2 + $0x20] sm:$0xff]
    %v88 = vld [vmem:[#allocation2 + $0x28] sm:$0xff]
    %v89 = vld [vmem:[#allocation2 + $0x30] sm:$0xff]
    %v90 = vld [vmem:[#allocation2 + $0x38] sm:$0xff]
    %v91 = vld [vmem:[#allocation5] sm:$0xf]
    %v92 = vld [vmem:[#allocation5 + $0x4] sm:$0xf]
    %v93 = vld [vmem:[#allocation5 + $0x8] sm:$0xf]
    %v94 = vld [vmem:[#allocation5 + $0xc] sm:$0xf]
    %v95 = vld [vmem:[#allocation5 + $0x10] sm:$0xf]
    %v96 = vld [vmem:[#allocation5 + $0x14] sm:$0xf]
    %v97 = vld [vmem:[#allocation5 + $0x18] sm:$0xf]
    %v98 = vld [vmem:[#allocation5 + $0x1c] sm:$0xf]
    %v99 = vld [vmem:[#allocation5 + $0x20] sm:$0xf]
    %v100 = vld [vmem:[#allocation5 + $0x24] sm:$0xf]
    %v101 = vld [vmem:[#allocation5 + $0x28] sm:$0xf]
    %v102 = vld [vmem:[#allocation5 + $0x2c] sm:$0xf]
    %v103 = vld [vmem:[#allocation5 + $0x30] sm:$0xf]
    %v104 = vld [vmem:[#allocation5 + $0x34] sm:$0xf]
    %v105 = vld [vmem:[#allocation5 + $0x38] sm:$0xf]
    %v106 = vld [vmem:[#allocation5 + $0x3c] sm:$0xf]
    %v107 = vld [vmem:[#allocation5 + $0x40] sm:$0xf]
    %v108 = vld [vmem:[#allocation5 + $0x44] sm:$0xf]
    %v109 = vld [vmem:[#allocation5 + $0x48] sm:$0xf]
    %v110 = vld [vmem:[#allocation5 + $0x4c] sm:$0xf]
    %v111 = vld [vmem:[#allocation5 + $0x50] sm:$0xf]
    %v112 = vld [vmem:[#allocation5 + $0x54] sm:$0xf]
    %v113 = vld [vmem:[#allocation5 + $0x58] sm:$0xf]
    %v114 = vld [vmem:[#allocation5 + $0x5c] sm:$0xf]
    %v115 = vld [vmem:[#allocation5 + $0x60] sm:$0xf]
    %v116 = vld [vmem:[#allocation5 + $0x64] sm:$0xf]
    %v117 = vld [vmem:[#allocation5 + $0x68] sm:$0xf]
    %v118 = vld [vmem:[#allocation5 + $0x6c] sm:$0xf]
    %v119 = vld [vmem:[#allocation5 + $0x70] sm:$0xf]
    %v120 = vld [vmem:[#allocation5 + $0x74] sm:$0xf]
    %v121 = vld [vmem:[#allocation5 + $0x78] sm:$0xf]
    %v122 = vld [vmem:[#allocation5 + $0x7c] sm:$0xf]
    %v123 = vld [vmem:[#allocation5 + $0x80] sm:$0xf]
    %v124 = vld [vmem:[#allocation5 + $0x84] sm:$0xf]
    %v125 = vld [vmem:[#allocation5 + $0x88] sm:$0xf]
    %v126 = vld [vmem:[#allocation5 + $0x8c] sm:$0xf]
    %v127 = vld [vmem:[#allocation5 + $0x90] sm:$0xf]
    %v128 = vld [vmem:[#allocation5 + $0x94] sm:$0xf]
    %v129 = vld [vmem:[#allocation5 + $0x98] sm:$0xf]
    %v130 = vld [vmem:[#allocation5 + $0x9c] sm:$0xf]
    %v131 = vld [vmem:[#allocation5 + $0xa0] sm:$0xf]
    %v132 = vld [vmem:[#allocation5 + $0xa4] sm:$0xf]
    %v133 = vld [vmem:[#allocation5 + $0xa8] sm:$0xf]
    %v134 = vld [vmem:[#allocation5 + $0xac] sm:$0xf]
    %v135 = vld [vmem:[#allocation5 + $0xb0] sm:$0xf]
    %v136 = vld [vmem:[#allocation5 + $0xb4] sm:$0xf]
    %v137 = vld [vmem:[#allocation5 + $0xb8] sm:$0xf]
    %v138 = vld [vmem:[#allocation5 + $0xbc] sm:$0xf]
    %v139 = vld [vmem:[#allocation5 + $0xc0] sm:$0xf]
    %v140 = vld [vmem:[#allocation5 + $0xc4] sm:$0xf]
    %v141 = vld [vmem:[#allocation5 + $0xc8] sm:$0xf]
    %v142 = vld [vmem:[#allocation5 + $0xcc] sm:$0xf]
    %v143 = vld [vmem:[#allocation5 + $0xd0] sm:$0xf]
    %v144 = vld [vmem:[#allocation5 + $0xd4] sm:$0xf]
    %v145 = vld [vmem:[#allocation5 + $0xd8] sm:$0xf]
    %v146 = vld [vmem:[#allocation5 + $0xdc] sm:$0xf]
    %v147 = vld [vmem:[#allocation5 + $0xe0] sm:$0xf]
    %v148 = vld [vmem:[#allocation5 + $0xe4] sm:$0xf]
    %v149 = vld [vmem:[#allocation5 + $0xe8] sm:$0xf]
    %v150 = vld [vmem:[#allocation5 + $0xec] sm:$0xf]
    %v151 = vld [vmem:[#allocation5 + $0xf0] sm:$0xf]
    %v152 = vld [vmem:[#allocation5 + $0xf4] sm:$0xf]
    %v153 = vld [vmem:[#allocation5 + $0xf8] sm:$0xf]
    %v154 = vld [vmem:[#allocation5 + $0xfc] sm:$0xf]
    %v155 = vld [vmem:[#allocation5 + $0x100] sm:$0xf]
    %v156 = vld [vmem:[#allocation5 + $0x104] sm:$0xf]
    %v157 = vld [vmem:[#allocation5 + $0x108] sm:$0xf]
    %v158 = vld [vmem:[#allocation5 + $0x10c] sm:$0xf]
    %v159 = vld [vmem:[#allocation5 + $0x110] sm:$0xf]
    %v160 = vld [vmem:[#allocation5 + $0x114] sm:$0xf]
    %v161 = vld [vmem:[#allocation5 + $0x118] sm:$0xf]
    %v162 = vld [vmem:[#allocation5 + $0x11c] sm:$0xf]
    %v163 = vld [vmem:[#allocation5 + $0x120] sm:$0xf]
    %v164 = vld [vmem:[#allocation5 + $0x124] sm:$0xf]
    %v165 = vld [vmem:[#allocation5 + $0x128] sm:$0xf]
    %v166 = vld [vmem:[#allocation5 + $0x12c] sm:$0xf]
    %v167 = vld [vmem:[#allocation5 + $0x130] sm:$0xf]
    %v168 = vld [vmem:[#allocation5 + $0x134] sm:$0xf]
    %v169 = vld [vmem:[#allocation5 + $0x138] sm:$0xf]
    %v170 = vld [vmem:[#allocation5 + $0x13c] sm:$0xf]
    %v171 = vld [vmem:[#allocation5 + $0x140] sm:$0xf]
    %v172 = vld [vmem:[#allocation5 + $0x144] sm:$0xf]
    %v173 = vld [vmem:[#allocation5 + $0x148] sm:$0xf]
    %v174 = vld [vmem:[#allocation5 + $0x14c] sm:$0xf]
    %v175 = vld [vmem:[#allocation5 + $0x150] sm:$0xf]
    %v176 = vld [vmem:[#allocation5 + $0x154] sm:$0xf]
    %v177 = vld [vmem:[#allocation5 + $0x158] sm:$0xf]
    %v178 = vld [vmem:[#allocation5 + $0x15c] sm:$0xf]
    %v179 = vld [vmem:[#allocation5 + $0x160] sm:$0xf]
    %v180 = vld [vmem:[#allocation5 + $0x164] sm:$0xf]
    %v181 = vld [vmem:[#allocation5 + $0x168] sm:$0xf]
    %v182 = vld [vmem:[#allocation5 + $0x16c] sm:$0xf]
    %v183 = vld [vmem:[#allocation5 + $0x170] sm:$0xf]
    %v184 = vld [vmem:[#allocation5 + $0x174] sm:$0xf]
    %v185 = vld [vmem:[#allocation5 + $0x178] sm:$0xf]
    %v186 = vld [vmem:[#allocation5 + $0x17c] sm:$0xf]
    %v187 = vld [vmem:[#allocation5 + $0x180] sm:$0xf]
    %v188 = vld [vmem:[#allocation5 + $0x184] sm:$0xf]
    %v189 = vld [vmem:[#allocation5 + $0x188] sm:$0xf]
    %v190 = vld [vmem:[#allocation5 + $0x18c] sm:$0xf]
    %v191 = vld [vmem:[#allocation5 + $0x190] sm:$0xf]
    %v192 = vld [vmem:[#allocation5 + $0x194] sm:$0xf]
    %v193 = vld [vmem:[#allocation5 + $0x198] sm:$0xf]
    %v194 = vld [vmem:[#allocation5 + $0x19c] sm:$0xf]
    %v195 = vld [vmem:[#allocation5 + $0x1a0] sm:$0xf]
    %v196 = vld [vmem:[#allocation5 + $0x1a4] sm:$0xf]
    %v197 = vld [vmem:[#allocation5 + $0x1a8] sm:$0xf]
    %v198 = vld [vmem:[#allocation5 + $0x1ac] sm:$0xf]
    %v199 = vld [vmem:[#allocation5 + $0x1b0] sm:$0xf]
    %v200 = vld [vmem:[#allocation5 + $0x1b4] sm:$0xf]
    %v201 = vld [vmem:[#allocation5 + $0x1b8] sm:$0xf]
    %v202 = vld [vmem:[#allocation5 + $0x1bc] sm:$0xf]
    %v203 = vld [vmem:[#allocation5 + $0x1c0] sm:$0xf]
    %v204 = vld [vmem:[#allocation5 + $0x1c4] sm:$0xf]
    %v205 = vld [vmem:[#allocation5 + $0x1c8] sm:$0xf]
    %v206 = vld [vmem:[#allocation5 + $0x1cc] sm:$0xf]
    %v207 = vld [vmem:[#allocation5 + $0x1d0] sm:$0xf]
    %v208 = vld [vmem:[#allocation5 + $0x1d4] sm:$0xf]
    %v209 = vld [vmem:[#allocation5 + $0x1d8] sm:$0xf]
    %v210 = vld [vmem:[#allocation5 + $0x1dc] sm:$0xf]
    %v211 = vld [vmem:[#allocation5 + $0x1e0] sm:$0xf]
    %v212 = vld [vmem:[#allocation5 + $0x1e4] sm:$0xf]
    %v213 = vld [vmem:[#allocation5 + $0x1e8] sm:$0xf]
    %v214 = vld [vmem:[#allocation5 + $0x1ec] sm:$0xf]
    %v215 = vld [vmem:[#allocation5 + $0x1f0] sm:$0xf]
    %v216 = vld [vmem:[#allocation5 + $0x1f4] sm:$0xf]
    %v217 = vld [vmem:[#allocation5 + $0x1f8] sm:$0xf]
    %v218 = vld [vmem:[#allocation5 + $0x1fc] sm:$0xf]
    %v219 = vld [vmem:[%s2] sm:$0x1]
    %v221 = vlaneseq
    %v222 = vshrl.u32 %v221, 7
    %v223 = vsub.s32 0, %v222
    %v224 = vrot.slane %v219, %v223
    %v234 = vunpack.c.l.b16 %v83
    %v235 = vunpack.c.h.b16 %v83
    %v236 = vunpack.c.l.b16 %v84
    %v237 = vunpack.c.h.b16 %v84
    %v238 = vunpack.c.l.b16 %v85
    %v239 = vunpack.c.h.b16 %v85
    %v240 = vunpack.c.l.b16 %v86
    %v241 = vunpack.c.h.b16 %v86
    %v242 = vunpack.c.l.b16 %v87
    %v243 = vunpack.c.h.b16 %v87
    %v244 = vunpack.c.l.b16 %v88
    %v245 = vunpack.c.h.b16 %v88
    %v246 = vunpack.c.l.b16 %v89
    %v247 = vunpack.c.h.b16 %v89
    %v248 = vunpack.c.l.b16 %v90
    %v249 = vunpack.c.h.b16 %v90
    %v250 = vpack.c.b16 %v242, %v234
    %v251 = vpack.c.b16 %v243, %v235
    %v252 = vpack.c.b16 %v244, %v236
    %v253 = vpack.c.b16 %v245, %v237
    %v254 = vpack.c.b16 %v246, %v238
    %v255 = vpack.c.b16 %v247, %v239
    %v256 = vpack.c.b16 %v248, %v240
    %v257 = vpack.c.b16 %v249, %v241
    %v394 = vunpack.c.l.b16 %v91
    %v395 = vunpack.c.l.b16 %v92
    %v396 = vunpack.c.l.b16 %v93
    %v397 = vunpack.c.l.b16 %v94
    %v398 = vunpack.c.l.b16 %v95
    %v399 = vunpack.c.l.b16 %v96
    %v400 = vunpack.c.l.b16 %v97
    %v401 = vunpack.c.l.b16 %v98
    %v402 = vunpack.c.l.b16 %v99
    %v403 = vunpack.c.l.b16 %v100
    %v404 = vunpack.c.l.b16 %v101
    %v405 = vunpack.c.l.b16 %v102
    %v406 = vunpack.c.l.b16 %v103
    %v407 = vunpack.c.l.b16 %v104
    %v408 = vunpack.c.l.b16 %v105
    %v409 = vunpack.c.l.b16 %v106
    %v410 = vunpack.c.l.b16 %v107
    %v411 = vunpack.c.l.b16 %v108
    %v412 = vunpack.c.l.b16 %v109
    %v413 = vunpack.c.l.b16 %v110
    %v414 = vunpack.c.l.b16 %v111
    %v415 = vunpack.c.l.b16 %v112
    %v416 = vunpack.c.l.b16 %v113
    %v417 = vunpack.c.l.b16 %v114
    %v418 = vunpack.c.l.b16 %v115
    %v419 = vunpack.c.l.b16 %v116
    %v420 = vunpack.c.l.b16 %v117
    %v421 = vunpack.c.l.b16 %v118
    %v422 = vunpack.c.l.b16 %v119
    %v423 = vunpack.c.l.b16 %v120
    %v424 = vunpack.c.l.b16 %v121
    %v425 = vunpack.c.l.b16 %v122
    %v426 = vunpack.c.l.b16 %v123
    %v427 = vunpack.c.l.b16 %v124
    %v428 = vunpack.c.l.b16 %v125
    %v429 = vunpack.c.l.b16 %v126
    %v430 = vunpack.c.l.b16 %v127
    %v431 = vunpack.c.l.b16 %v128
    %v432 = vunpack.c.l.b16 %v129
    %v433 = vunpack.c.l.b16 %v130
    %v434 = vunpack.c.l.b16 %v131
    %v435 = vunpack.c.l.b16 %v132
    %v436 = vunpack.c.l.b16 %v133
    %v437 = vunpack.c.l.b16 %v134
    %v438 = vunpack.c.l.b16 %v135
    %v439 = vunpack.c.l.b16 %v136
    %v440 = vunpack.c.l.b16 %v137
    %v441 = vunpack.c.l.b16 %v138
    %v442 = vunpack.c.l.b16 %v139
    %v443 = vunpack.c.l.b16 %v140
    %v444 = vunpack.c.l.b16 %v141
    %v445 = vunpack.c.l.b16 %v142
    %v446 = vunpack.c.l.b16 %v143
    %v447 = vunpack.c.l.b16 %v144
    %v448 = vunpack.c.l.b16 %v145
    %v449 = vunpack.c.l.b16 %v146
    %v450 = vunpack.c.l.b16 %v147
    %v451 = vunpack.c.l.b16 %v148
    %v452 = vunpack.c.l.b16 %v149
    %v453 = vunpack.c.l.b16 %v150
    %v454 = vunpack.c.l.b16 %v151
    %v455 = vunpack.c.l.b16 %v152
    %v456 = vunpack.c.l.b16 %v153
    %v457 = vunpack.c.l.b16 %v154
    %v458 = vunpack.c.l.b16 %v155
    %v459 = vunpack.c.l.b16 %v156
    %v460 = vunpack.c.l.b16 %v157
    %v461 = vunpack.c.l.b16 %v158
    %v462 = vunpack.c.l.b16 %v159
    %v463 = vunpack.c.l.b16 %v160
    %v464 = vunpack.c.l.b16 %v161
    %v465 = vunpack.c.l.b16 %v162
    %v466 = vunpack.c.l.b16 %v163
    %v467 = vunpack.c.l.b16 %v164
    %v468 = vunpack.c.l.b16 %v165
    %v469 = vunpack.c.l.b16 %v166
    %v470 = vunpack.c.l.b16 %v167
    %v471 = vunpack.c.l.b16 %v168
    %v472 = vunpack.c.l.b16 %v169
    %v473 = vunpack.c.l.b16 %v170
    %v474 = vunpack.c.l.b16 %v171
    %v475 = vunpack.c.l.b16 %v172
    %v476 = vunpack.c.l.b16 %v173
    %v477 = vunpack.c.l.b16 %v174
    %v478 = vunpack.c.l.b16 %v175
    %v479 = vunpack.c.l.b16 %v176
    %v480 = vunpack.c.l.b16 %v177
    %v481 = vunpack.c.l.b16 %v178
    %v482 = vunpack.c.l.b16 %v179
    %v483 = vunpack.c.l.b16 %v180
    %v484 = vunpack.c.l.b16 %v181
    %v485 = vunpack.c.l.b16 %v182
    %v486 = vunpack.c.l.b16 %v183
    %v487 = vunpack.c.l.b16 %v184
    %v488 = vunpack.c.l.b16 %v185
    %v489 = vunpack.c.l.b16 %v186
    %v490 = vunpack.c.l.b16 %v187
    %v491 = vunpack.c.l.b16 %v188
    %v492 = vunpack.c.l.b16 %v189
    %v493 = vunpack.c.l.b16 %v190
    %v494 = vunpack.c.l.b16 %v191
    %v495 = vunpack.c.l.b16 %v192
    %v496 = vunpack.c.l.b16 %v193
    %v497 = vunpack.c.l.b16 %v194
    %v498 = vunpack.c.l.b16 %v195
    %v499 = vunpack.c.l.b16 %v196
    %v500 = vunpack.c.l.b16 %v197
    %v501 = vunpack.c.l.b16 %v198
    %v502 = vunpack.c.l.b16 %v199
    %v503 = vunpack.c.l.b16 %v200
    %v504 = vunpack.c.l.b16 %v201
    %v505 = vunpack.c.l.b16 %v202
    %v506 = vunpack.c.l.b16 %v203
    %v507 = vunpack.c.l.b16 %v204
    %v508 = vunpack.c.l.b16 %v205
    %v509 = vunpack.c.l.b16 %v206
    %v510 = vunpack.c.l.b16 %v207
    %v511 = vunpack.c.l.b16 %v208
    %v512 = vunpack.c.l.b16 %v209
    %v513 = vunpack.c.l.b16 %v210
    %v514 = vunpack.c.l.b16 %v211
    %v515 = vunpack.c.l.b16 %v212
    %v516 = vunpack.c.l.b16 %v213
    %v517 = vunpack.c.l.b16 %v214
    %v518 = vunpack.c.l.b16 %v215
    %v519 = vunpack.c.l.b16 %v216
    %v520 = vunpack.c.l.b16 %v217
    %v521 = vunpack.c.l.b16 %v218
    %v522 = vpack.c.b16 %v395, %v394
    %v523 = vpack.c.b16 %v397, %v396
    %v524 = vpack.c.b16 %v399, %v398
    %v525 = vpack.c.b16 %v401, %v400
    %v526 = vpack.c.b16 %v403, %v402
    %v527 = vpack.c.b16 %v405, %v404
    %v528 = vpack.c.b16 %v407, %v406
    %v529 = vpack.c.b16 %v409, %v408
    %v530 = vpack.c.b16 %v411, %v410
    %v531 = vpack.c.b16 %v413, %v412
    %v532 = vpack.c.b16 %v415, %v414
    %v533 = vpack.c.b16 %v417, %v416
    %v534 = vpack.c.b16 %v419, %v418
    %v535 = vpack.c.b16 %v421, %v420
    %v536 = vpack.c.b16 %v423, %v422
    %v537 = vpack.c.b16 %v425, %v424
    %v538 = vpack.c.b16 %v427, %v426
    %v539 = vpack.c.b16 %v429, %v428
    %v540 = vpack.c.b16 %v431, %v430
    %v541 = vpack.c.b16 %v433, %v432
    %v542 = vpack.c.b16 %v435, %v434
    %v543 = vpack.c.b16 %v437, %v436
    %v544 = vpack.c.b16 %v439, %v438
    %v545 = vpack.c.b16 %v441, %v440
    %v546 = vpack.c.b16 %v443, %v442
    %v547 = vpack.c.b16 %v445, %v444
    %v548 = vpack.c.b16 %v447, %v446
    %v549 = vpack.c.b16 %v449, %v448
    %v550 = vpack.c.b16 %v451, %v450
    %v551 = vpack.c.b16 %v453, %v452
    %v552 = vpack.c.b16 %v455, %v454
    %v553 = vpack.c.b16 %v457, %v456
    %v554 = vpack.c.b16 %v459, %v458
    %v555 = vpack.c.b16 %v461, %v460
    %v556 = vpack.c.b16 %v463, %v462
    %v557 = vpack.c.b16 %v465, %v464
    %v558 = vpack.c.b16 %v467, %v466
    %v559 = vpack.c.b16 %v469, %v468
    %v560 = vpack.c.b16 %v471, %v470
    %v561 = vpack.c.b16 %v473, %v472
    %v562 = vpack.c.b16 %v475, %v474
    %v563 = vpack.c.b16 %v477, %v476
    %v564 = vpack.c.b16 %v479, %v478
    %v565 = vpack.c.b16 %v481, %v480
    %v566 = vpack.c.b16 %v483, %v482
    %v567 = vpack.c.b16 %v485, %v484
    %v568 = vpack.c.b16 %v487, %v486
    %v569 = vpack.c.b16 %v489, %v488
    %v570 = vpack.c.b16 %v491, %v490
    %v571 = vpack.c.b16 %v493, %v492
    %v572 = vpack.c.b16 %v495, %v494
    %v573 = vpack.c.b16 %v497, %v496
    %v574 = vpack.c.b16 %v499, %v498
    %v575 = vpack.c.b16 %v501, %v500
    %v576 = vpack.c.b16 %v503, %v502
    %v577 = vpack.c.b16 %v505, %v504
    %v578 = vpack.c.b16 %v507, %v506
    %v579 = vpack.c.b16 %v509, %v508
    %v580 = vpack.c.b16 %v511, %v510
    %v581 = vpack.c.b16 %v513, %v512
    %v582 = vpack.c.b16 %v515, %v514
    %v583 = vpack.c.b16 %v517, %v516
    %v584 = vpack.c.b16 %v519, %v518
    %v585 = vpack.c.b16 %v521, %v520
    %650 = vmatprep.subr.bf16.mxu0 0
    %651 = vmatpush1.bf16.msra.mxu0 %v522
    %652 = vmatprep.subr.bf16.mxu0 0
    %653 = vmatpush1.bf16.msra.mxu0 %v523
    %654 = vmatprep.subr.bf16.mxu0 0
    %655 = vmatpush1.bf16.msra.mxu0 %v524
    %656 = vmatprep.subr.bf16.mxu0 0
    %657 = vmatpush1.bf16.msra.mxu0 %v525
    %658 = vmatprep.subr.bf16.mxu0 0
    %659 = vmatpush1.bf16.msra.mxu0 %v526
    %660 = vmatprep.subr.bf16.mxu0 0
    %661 = vmatpush1.bf16.msra.mxu0 %v527
    %662 = vmatprep.subr.bf16.mxu0 0
    %663 = vmatpush1.bf16.msra.mxu0 %v528
    %664 = vmatprep.subr.bf16.mxu0 0
    %665 = vmatpush1.bf16.msra.mxu0 %v529
    %666 = vmatprep.subr.bf16.mxu0 0
    %667 = vmatpush1.bf16.msra.mxu0 %v530
    %668 = vmatprep.subr.bf16.mxu0 0
    %669 = vmatpush1.bf16.msra.mxu0 %v531
    %670 = vmatprep.subr.bf16.mxu0 0
    %671 = vmatpush1.bf16.msra.mxu0 %v532
    %672 = vmatprep.subr.bf16.mxu0 0
    %673 = vmatpush1.bf16.msra.mxu0 %v533
    %674 = vmatprep.subr.bf16.mxu0 0
    %675 = vmatpush1.bf16.msra.mxu0 %v534
    %676 = vmatprep.subr.bf16.mxu0 0
    %677 = vmatpush1.bf16.msra.mxu0 %v535
    %678 = vmatprep.subr.bf16.mxu0 0
    %679 = vmatpush1.bf16.msra.mxu0 %v536
    %680 = vmatprep.subr.bf16.mxu0 0
    %681 = vmatpush1.bf16.msra.mxu0 %v537
    %682 = vmatprep.mubr.bf16.mxu0 %v251
    %683 = vmatmul.mubr.bf16.gmra.mrb[0].mxu0 %v250
    %v684 = vpop.f32.mrb[0].mxu0
    %v685 = vadd.f32 %v224, %v684
    %v686 = vpop.f32.mrb[0].mxu0
    %v687 = vpop.f32.mrb[0].mxu0
    %v688 = vadd.f32 %v224, %v687
    %v689 = vpop.f32.mrb[0].mxu0
    %690 = vdwg.mxu0
    %691 = vmatprep.subr.bf16.mxu0 0
    %692 = vmatpush1.bf16.msra.mxu0 %v538
    %693 = vmatprep.subr.bf16.mxu0 0
    %694 = vmatpush1.bf16.msra.mxu0 %v539
    %695 = vmatprep.subr.bf16.mxu0 0
    %696 = vmatpush1.bf16.msra.mxu0 %v540
    %697 = vmatprep.subr.bf16.mxu0 0
    %698 = vmatpush1.bf16.msra.mxu0 %v541
    %699 = vmatprep.subr.bf16.mxu0 0
    %700 = vmatpush1.bf16.msra.mxu0 %v542
    %701 = vmatprep.subr.bf16.mxu0 0
    %702 = vmatpush1.bf16.msra.mxu0 %v543
    %703 = vmatprep.subr.bf16.mxu0 0
    %704 = vmatpush1.bf16.msra.mxu0 %v544
    %705 = vmatprep.subr.bf16.mxu0 0
    %706 = vmatpush1.bf16.msra.mxu0 %v545
    %707 = vmatprep.subr.bf16.mxu0 0
    %708 = vmatpush1.bf16.msra.mxu0 %v546
    %709 = vmatprep.subr.bf16.mxu0 0
    %710 = vmatpush1.bf16.msra.mxu0 %v547
    %711 = vmatprep.subr.bf16.mxu0 0
    %712 = vmatpush1.bf16.msra.mxu0 %v548
    %713 = vmatprep.subr.bf16.mxu0 0
    %714 = vmatpush1.bf16.msra.mxu0 %v549
    %715 = vmatprep.subr.bf16.mxu0 0
    %716 = vmatpush1.bf16.msra.mxu0 %v550
    %717 = vmatprep.subr.bf16.mxu0 0
    %718 = vmatpush1.bf16.msra.mxu0 %v551
    %719 = vmatprep.subr.bf16.mxu0 0
    %720 = vmatpush1.bf16.msra.mxu0 %v552
    %721 = vmatprep.subr.bf16.mxu0 0
    %722 = vmatpush1.bf16.msra.mxu0 %v553
    %723 = vmatprep.mubr.bf16.mxu0 %v253
    %724 = vmatmul.mubr.bf16.gmra.mrb[0].mxu0 %v252
    %v725 = vpop.f32.mrb[0].mxu0
    %v726 = vadd.f32 %v685, %v725
    %v727 = vpop.f32.mrb[0].mxu0
    %v728 = vpop.f32.mrb[0].mxu0
    %v729 = vadd.f32 %v688, %v728
    %v730 = vpop.f32.mrb[0].mxu0
    %731 = vdwg.mxu0
    %732 = vmatprep.subr.bf16.mxu0 0
    %733 = vmatpush1.bf16.msra.mxu0 %v554
    %734 = vmatprep.subr.bf16.mxu0 0
    %735 = vmatpush1.bf16.msra.mxu0 %v555
    %736 = vmatprep.subr.bf16.mxu0 0
    %737 = vmatpush1.bf16.msra.mxu0 %v556
    %738 = vmatprep.subr.bf16.mxu0 0
    %739 = vmatpush1.bf16.msra.mxu0 %v557
    %740 = vmatprep.subr.bf16.mxu0 0
    %741 = vmatpush1.bf16.msra.mxu0 %v558
    %742 = vmatprep.subr.bf16.mxu0 0
    %743 = vmatpush1.bf16.msra.mxu0 %v559
    %744 = vmatprep.subr.bf16.mxu0 0
    %745 = vmatpush1.bf16.msra.mxu0 %v560
    %746 = vmatprep.subr.bf16.mxu0 0
    %747 = vmatpush1.bf16.msra.mxu0 %v561
    %748 = vmatprep.subr.bf16.mxu0 0
    %749 = vmatpush1.bf16.msra.mxu0 %v562
    %750 = vmatprep.subr.bf16.mxu0 0
    %751 = vmatpush1.bf16.msra.mxu0 %v563
    %752 = vmatprep.subr.bf16.mxu0 0
    %753 = vmatpush1.bf16.msra.mxu0 %v564
    %754 = vmatprep.subr.bf16.mxu0 0
    %755 = vmatpush1.bf16.msra.mxu0 %v565
    %756 = vmatprep.subr.bf16.mxu0 0
    %757 = vmatpush1.bf16.msra.mxu0 %v566
    %758 = vmatprep.subr.bf16.mxu0 0
    %759 = vmatpush1.bf16.msra.mxu0 %v567
    %760 = vmatprep.subr.bf16.mxu0 0
    %761 = vmatpush1.bf16.msra.mxu0 %v568
    %762 = vmatprep.subr.bf16.mxu0 0
    %763 = vmatpush1.bf16.msra.mxu0 %v569
    %764 = vmatprep.mubr.bf16.mxu0 %v255
    %765 = vmatmul.mubr.bf16.gmra.mrb[0].mxu0 %v254
    %v766 = vpop.f32.mrb[0].mxu0
    %v767 = vadd.f32 %v726, %v766
    %v768 = vpop.f32.mrb[0].mxu0
    %v769 = vpop.f32.mrb[0].mxu0
    %v770 = vadd.f32 %v729, %v769
    %v771 = vpop.f32.mrb[0].mxu0
    %772 = vdwg.mxu0
    %773 = vmatprep.subr.bf16.mxu0 0
    %774 = vmatpush1.bf16.msra.mxu0 %v570
    %775 = vmatprep.subr.bf16.mxu0 0
    %776 = vmatpush1.bf16.msra.mxu0 %v571
    %777 = vmatprep.subr.bf16.mxu0 0
    %778 = vmatpush1.bf16.msra.mxu0 %v572
    %779 = vmatprep.subr.bf16.mxu0 0
    %780 = vmatpush1.bf16.msra.mxu0 %v573
    %781 = vmatprep.subr.bf16.mxu0 0
    %782 = vmatpush1.bf16.msra.mxu0 %v574
    %783 = vmatprep.subr.bf16.mxu0 0
    %784 = vmatpush1.bf16.msra.mxu0 %v575
    %785 = vmatprep.subr.bf16.mxu0 0
    %786 = vmatpush1.bf16.msra.mxu0 %v576
    %787 = vmatprep.subr.bf16.mxu0 0
    %788 = vmatpush1.bf16.msra.mxu0 %v577
    %789 = vmatprep.subr.bf16.mxu0 0
    %790 = vmatpush1.bf16.msra.mxu0 %v578
    %791 = vmatprep.subr.bf16.mxu0 0
    %792 = vmatpush1.bf16.msra.mxu0 %v579
    %793 = vmatprep.subr.bf16.mxu0 0
    %794 = vmatpush1.bf16.msra.mxu0 %v580
    %795 = vmatprep.subr.bf16.mxu0 0
    %796 = vmatpush1.bf16.msra.mxu0 %v581
    %797 = vmatprep.subr.bf16.mxu0 0
    %798 = vmatpush1.bf16.msra.mxu0 %v582
    %799 = vmatprep.subr.bf16.mxu0 0
    %800 = vmatpush1.bf16.msra.mxu0 %v583
    %801 = vmatprep.subr.bf16.mxu0 0
    %802 = vmatpush1.bf16.msra.mxu0 %v584
    %803 = vmatprep.subr.bf16.mxu0 0
    %804 = vmatpush1.bf16.msra.mxu0 %v585
    %805 = vmatprep.mubr.bf16.mxu0 %v257
    %806 = vmatmul.mubr.bf16.gmra.mrb[0].mxu0 %v256
    %v807 = vpop.f32.mrb[0].mxu0
    %v808 = vadd.f32 %v767, %v807
    %v809 = vpop.f32.mrb[0].mxu0
    %v810 = vpop.f32.mrb[0].mxu0
    %v811 = vadd.f32 %v770, %v810
    %v812 = vpop.f32.mrb[0].mxu0
    %813 = vdwg.mxu0
    %v814 = vmax.f32 %v808, 0.0
    %v815 = vmax.f32 %v811, 0.0
    %v816 = vpack.c.bf16 %v815, %v814
    %v817 = vld [vmem:[#allocation7] sm:$0xf]
    %v818 = vld [vmem:[#allocation7 + $0x4] sm:$0xf]
    %v819 = vld [vmem:[#allocation7 + $0x8] sm:$0xf]
    %v820 = vld [vmem:[#allocation7 + $0xc] sm:$0xf]
    %v821 = vld [vmem:[#allocation7 + $0x10] sm:$0xf]
    %v822 = vld [vmem:[#allocation7 + $0x14] sm:$0xf]
    %v823 = vld [vmem:[#allocation7 + $0x18] sm:$0xf]
    %v824 = vld [vmem:[#allocation7 + $0x1c] sm:$0xf]
    %v825 = vld [vmem:[#allocation7 + $0x20] sm:$0xf]
    %v826 = vld [vmem:[#allocation7 + $0x24] sm:$0xf]
    %v827 = vld [vmem:[#allocation7 + $0x28] sm:$0xf]
    %v828 = vld [vmem:[#allocation7 + $0x2c] sm:$0xf]
    %v829 = vld [vmem:[#allocation7 + $0x30] sm:$0xf]
    %v830 = vld [vmem:[#allocation7 + $0x34] sm:$0xf]
    %v831 = vld [vmem:[#allocation7 + $0x38] sm:$0xf]
    %v832 = vld [vmem:[#allocation7 + $0x3c] sm:$0xf]
    %v833 = vld [vmem:[%s4] sm:$0x1]
    %v835 = vlaneseq
    %v836 = vshrl.u32 %v835, 7
    %v837 = vsub.s32 0, %v836
    %v838 = vrot.slane %v833, %v837
    %v856 = vunpack.c.l.b16 %v817
    %v857 = vunpack.c.l.b16 %v818
    %v858 = vunpack.c.l.b16 %v819
    %v859 = vunpack.c.l.b16 %v820
    %v860 = vunpack.c.l.b16 %v821
    %v861 = vunpack.c.l.b16 %v822
    %v862 = vunpack.c.l.b16 %v823
    %v863 = vunpack.c.l.b16 %v824
    %v864 = vunpack.c.l.b16 %v825
    %v865 = vunpack.c.l.b16 %v826
    %v866 = vunpack.c.l.b16 %v827
    %v867 = vunpack.c.l.b16 %v828
    %v868 = vunpack.c.l.b16 %v829
    %v869 = vunpack.c.l.b16 %v830
    %v870 = vunpack.c.l.b16 %v831
    %v871 = vunpack.c.l.b16 %v832
    %v872 = vpack.c.b16 %v857, %v856
    %v873 = vpack.c.b16 %v859, %v858
    %v874 = vpack.c.b16 %v861, %v860
    %v875 = vpack.c.b16 %v863, %v862
    %v876 = vpack.c.b16 %v865, %v864
    %v877 = vpack.c.b16 %v867, %v866
    %v878 = vpack.c.b16 %v869, %v868
    %v879 = vpack.c.b16 %v871, %v870
    %888 = vmatprep.subr.bf16.mxu0 0
    %889 = vmatpush1.bf16.msra.mxu0 %v872
    %890 = vmatprep.subr.bf16.mxu0 0
    %891 = vmatpush1.bf16.msra.mxu0 %v873
    %892 = vmatprep.subr.bf16.mxu0 0
    %893 = vmatpush1.bf16.msra.mxu0 %v874
    %894 = vmatprep.subr.bf16.mxu0 0
    %895 = vmatpush1.bf16.msra.mxu0 %v875
    %896 = vmatprep.subr.bf16.mxu0 0
    %897 = vmatpush1.bf16.msra.mxu0 %v876
    %898 = vmatprep.subr.bf16.mxu0 0
    %899 = vmatpush1.bf16.msra.mxu0 %v877
    %900 = vmatprep.subr.bf16.mxu0 0
    %901 = vmatpush1.bf16.msra.mxu0 %v878
    %902 = vmatprep.subr.bf16.mxu0 0
    %903 = vmatpush1.bf16.msra.mxu0 %v879
    %904 = vmatprep.subr.bf16.mxu0 0
    %905 = vmatpush1.bf16.msra.mxu0 0
    %906 = vmatprep.subr.bf16.mxu0 0
    %907 = vmatpush1.bf16.msra.mxu0 0
    %908 = vmatprep.subr.bf16.mxu0 0
    %909 = vmatpush1.bf16.msra.mxu0 0
    %910 = vmatprep.subr.bf16.mxu0 0
    %911 = vmatpush1.bf16.msra.mxu0 0
    %912 = vmatprep.subr.bf16.mxu0 0
    %913 = vmatpush1.bf16.msra.mxu0 0
    %914 = vmatprep.subr.bf16.mxu0 0
    %915 = vmatpush1.bf16.msra.mxu0 0
    %916 = vmatprep.subr.bf16.mxu0 0
    %917 = vmatpush1.bf16.msra.mxu0 0
    %918 = vmatprep.subr.bf16.mxu0 0
    %919 = vmatpush1.bf16.msra.mxu0 0
    %920 = vmatprep.mubr.bf16.mxu0 0
    %921 = vmatmul.mubr.bf16.gmra.mrb[0].mxu0 %v816
    %v922 = vpop.f32.mrb[0].mxu0
    %v923 = vadd.f32 %v838, %v922
    %v924 = vpop.f32.mrb[0].mxu0
    %v925 = vpop.f32.mrb[0].mxu0
    %v926 = vadd.f32 %v838, %v925
    %v927 = vpop.f32.mrb[0].mxu0
    %928 = vdwg.mxu0
    %v929 = vmax.f32 %v923, 0.0
    %v930 = vmax.f32 %v926, 0.0
    %v931 = vpack.c.bf16 %v930, %v929
    %v932 = vld [vmem:[#allocation8] sm:$0xf]
    %v933 = vld [vmem:[#allocation8 + $0x4] sm:$0xf]
    %v934 = vld [vmem:[#allocation8 + $0x8] sm:$0xf]
    %v935 = vld [vmem:[#allocation8 + $0xc] sm:$0xf]
    %v936 = vld [vmem:[#allocation8 + $0x10] sm:$0xf]
    %v937 = vld [vmem:[#allocation8 + $0x14] sm:$0xf]
    %v938 = vld [vmem:[#allocation8 + $0x18] sm:$0xf]
    %v939 = vld [vmem:[#allocation8 + $0x1c] sm:$0xf]
    %v940 = vld [vmem:[#allocation8 + $0x20] sm:$0xf]
    %v941 = vld [vmem:[#allocation8 + $0x24] sm:$0xf]
    %v942 = vld [vmem:[#allocation8 + $0x28] sm:$0xf]
    %v943 = vld [vmem:[#allocation8 + $0x2c] sm:$0xf]
    %v944 = vld [vmem:[#allocation8 + $0x30] sm:$0xf]
    %v945 = vld [vmem:[#allocation8 + $0x34] sm:$0xf]
    %v946 = vld [vmem:[#allocation8 + $0x38] sm:$0xf]
    %v947 = vld [vmem:[#allocation8 + $0x3c] sm:$0xf]
    %v948 = vld [vmem:[%s6] sm:$0x1]
    %v950 = vlaneseq
    %v951 = vshrl.u32 %v950, 7
    %v952 = vsub.s32 0, %v951
    %v953 = vrot.slane %v948, %v952
    %v971 = vunpack.c.l.b16 %v932
    %v972 = vunpack.c.l.b16 %v933
    %v973 = vunpack.c.l.b16 %v934
    %v974 = vunpack.c.l.b16 %v935
    %v975 = vunpack.c.l.b16 %v936
    %v976 = vunpack.c.l.b16 %v937
    %v977 = vunpack.c.l.b16 %v938
    %v978 = vunpack.c.l.b16 %v939
    %v979 = vunpack.c.l.b16 %v940
    %v980 = vunpack.c.l.b16 %v941
    %v981 = vunpack.c.l.b16 %v942
    %v982 = vunpack.c.l.b16 %v943
    %v983 = vunpack.c.l.b16 %v944
    %v984 = vunpack.c.l.b16 %v945
    %v985 = vunpack.c.l.b16 %v946
    %v986 = vunpack.c.l.b16 %v947
    %v987 = vpack.c.b16 %v972, %v971
    %v988 = vpack.c.b16 %v974, %v973
    %v989 = vpack.c.b16 %v976, %v975
    %v990 = vpack.c.b16 %v978, %v977
    %v991 = vpack.c.b16 %v980, %v979
    %v992 = vpack.c.b16 %v982, %v981
    %v993 = vpack.c.b16 %v984, %v983
    %v994 = vpack.c.b16 %v986, %v985
    %1003 = vmatprep.subr.bf16.mxu0 0
    %1004 = vmatpush1.bf16.msra.mxu0 %v987
    %1005 = vmatprep.subr.bf16.mxu0 0
    %1006 = vmatpush1.bf16.msra.mxu0 %v988
    %1007 = vmatprep.subr.bf16.mxu0 0
    %1008 = vmatpush1.bf16.msra.mxu0 %v989
    %1009 = vmatprep.subr.bf16.mxu0 0
    %1010 = vmatpush1.bf16.msra.mxu0 %v990
    %1011 = vmatprep.subr.bf16.mxu0 0
    %1012 = vmatpush1.bf16.msra.mxu0 %v991
    %1013 = vmatprep.subr.bf16.mxu0 0
    %1014 = vmatpush1.bf16.msra.mxu0 %v992
    %1015 = vmatprep.subr.bf16.mxu0 0
    %1016 = vmatpush1.bf16.msra.mxu0 %v993
    %1017 = vmatprep.subr.bf16.mxu0 0
    %1018 = vmatpush1.bf16.msra.mxu0 %v994
    %1019 = vmatprep.subr.bf16.mxu0 0
    %1020 = vmatpush1.bf16.msra.mxu0 0
    %1021 = vmatprep.subr.bf16.mxu0 0
    %1022 = vmatpush1.bf16.msra.mxu0 0
    %1023 = vmatprep.subr.bf16.mxu0 0
    %1024 = vmatpush1.bf16.msra.mxu0 0
    %1025 = vmatprep.subr.bf16.mxu0 0
    %1026 = vmatpush1.bf16.msra.mxu0 0
    %1027 = vmatprep.subr.bf16.mxu0 0
    %1028 = vmatpush1.bf16.msra.mxu0 0
    %1029 = vmatprep.subr.bf16.mxu0 0
    %1030 = vmatpush1.bf16.msra.mxu0 0
    %1031 = vmatprep.subr.bf16.mxu0 0
    %1032 = vmatpush1.bf16.msra.mxu0 0
    %1033 = vmatprep.subr.bf16.mxu0 0
    %1034 = vmatpush1.bf16.msra.mxu0 0
    %1035 = vmatprep.mubr.bf16.mxu0 0
    %1036 = vmatmul.mubr.bf16.gmra.mrb[0].mxu0 %v931
    %v1037 = vpop.f32.mrb[0].mxu0
    %v1038 = vadd.f32 %v953, %v1037
    %v1039 = vpop.f32.mrb[0].mxu0
    %v1040 = vpop.f32.mrb[0].mxu0
    %v1041 = vadd.f32 %v953, %v1040
    %v1042 = vpop.f32.mrb[0].mxu0
    %1043 = vdwg.mxu0
    %v1044 = vlaneseq
    %v1045 = vand.u32 %v1044, 127
    %vm1046 = vcmp.lt.s32.totalorder %v1045, 10
    %v1047 = vsel %vm1046, %v1038, -1e+30
    %v1048 = vsel %vm1046, %v1041, -1e+30
    %1049 = vmax.xlane.f32.xlu0 %v1047
    %v1050 = vpop.xlane.xlu0 %1049
    %1051 = vmax.xlane.f32.xlu0 %v1048
    %v1052 = vpop.xlane.xlu0 %1051
    %v1053 = vsub.f32 %v1047, %v1050
    %v1054 = vsub.f32 %v1048, %v1052
    %v1055 = vmul.f32 %v1053, 1.442695
    %v1056 = vpow.pop %v1055
    %v1057 = vmul.f32 %v1054, 1.442695
    %v1058 = vpow.pop %v1057
    %1059 = vadd.xlane.f32.xlu0 %v1056
    %v1060 = vpop.xlane.xlu0 %1059
    %1061 = vadd.xlane.f32.xlu0 %v1058
    %v1062 = vpop.xlane.xlu0 %1061
    %v1063 = vlog2.pop %v1060
    %v1064 = vmul.f32 %v1063, 0.6931472
    %v1065 = vlog2.pop %v1062
    %v1066 = vmul.f32 %v1065, 0.6931472
    %v1067 = vsub.f32 %v1053, %v1064
    %v1068 = vsub.f32 %v1054, %v1066
    %1069 = vst [vmem:[#allocation10] sm:$0xff] %v1067
    %1070 = vst [vmem:[#allocation10 + $0x8] sm:$0xff] %v1068
    // Predicated region
    $region46: #{tpu_custom_call.1} parent=1 // pred_check
      _
    $region47: #{tpu_custom_call.1} parent=1 // pred_check_branch
      %1072 = sbr.rel (0) target = $region49
    $region48: #{tpu_custom_call.1} parent=1 // pred_region
      %s1074 = ssub.s32 256, 256
      %1075 = vsyncadd [#allocation4], %s1074
      %s1076 = sshll.u32 [#allocation10], 4
      %s1077 = int_to_ptr.vmem [resolvable:$true] %s1076
      %1082 = dma.vmem_to_hbm [thread:$0]  %s1077, 256, %s7, [#allocation4], 128, 128, 8
    $region49: #{tpu_custom_call.1} parent=1 // pred_fallthru
      _
    // Predicated region
    $region50: #{tpu_custom_call.1} parent=1 // pred_check
      _
    $region51: #{tpu_custom_call.1} parent=1 // pred_check_branch
      %1084 = sbr.rel (0) target = $region53
    $region52: #{tpu_custom_call.1} parent=1 // pred_region
      %1085 = dma.done [#allocation4], 256
    $region53: #{tpu_custom_call.1} parent=1 // pred_fallthru
      _
    %1086 = vsyncpa [#allocation3], 1
    %1087 = vsyncpa [#allocation6], 1
    %1088 = vsyncpa [#allocation9], 1
    %1089 = vsyncpa [#allocation4], 1

</llo_original>
